<compile_context>
chip_gen: v5e
topology: v5e:2x2
jax: 0.10.0
libtpu: 0.0.40
codegen_flags: <defaults>
</compile_context>

<pallas_src>
import functools
import math

import jax
import jax.numpy as jnp
from jax.experimental import pallas as pl
from jax.experimental.pallas import tpu as pltpu


def _layernorm(x, gamma, beta, eps=1e-8):
    mean = jnp.mean(x, axis=-1, keepdims=True)
    var = jnp.mean(jnp.square(x - mean), axis=-1, keepdims=True)
    return (x - mean) * jax.lax.rsqrt(var + eps) * gamma + beta


def sasrec_kernel(num_heads,
                  item_seq_ref, pos_seq_ref, pos_emb_ref, neg_emb_ref,
                  attn_ln_g_ref, attn_ln_b_ref,
                  wq_ref, bq_ref, wkv_ref, bkv_ref,
                  wo_ref, bo_ref,
                  ffn_ln_g_ref, ffn_ln_b_ref,
                  conv1_w_ref, conv1_b_ref,
                  conv2_w_ref, conv2_b_ref,
                  last_ln_g_ref, last_ln_b_ref,
                  pos_out_ref, neg_out_ref,
                  x_scr):
    layer = pl.program_id(1)
    num_layers = pl.num_programs(1)
    Bt, T, H = item_seq_ref.shape
    hd = H // num_heads
    scale = jnp.float32(1.0 / math.sqrt(hd))

    # ---- residual stream init (once per batch tile) ----
    @pl.when(layer == 0)
    def _():
        x0 = item_seq_ref[...] * jnp.float32(math.sqrt(H)) + pos_seq_ref[...]
        x_scr[...] = x0.reshape(Bt * T, H)

    x = x_scr[...]                                        # (Bt*T, H) f32

    # causal mask (True = may attend); large-finite instead of -inf (defensive)
    row = jax.lax.broadcasted_iota(jnp.int32, (T, T), 0)
    col = jax.lax.broadcasted_iota(jnp.int32, (T, T), 1)
    causal = (col <= row)[None]                           # (1, T, T)

    # ---- attention block: Q from layernormed residual, K/V from raw residual ----
    q_in = _layernorm(x, attn_ln_g_ref[0], attn_ln_b_ref[0])       # (Bt*T, H) f32

    q = jnp.dot(q_in.astype(jnp.bfloat16), wq_ref[0],
                preferred_element_type=jnp.float32) + bq_ref[0]    # (Bt*T, H)
    kv = jnp.dot(x.astype(jnp.bfloat16), wkv_ref[0],
                 preferred_element_type=jnp.float32) + bkv_ref[0]  # (Bt*T, 2H)

    # fold 1/sqrt(hd) into Q (one (Bt*T, H) multiply instead of nh (T, T) ones)
    q3 = (q * scale).reshape(Bt, T, H)
    kv3 = kv.reshape(Bt, T, 2 * H)
    w_out = wo_ref[0]                                     # (H, H) bf16

    acc = jnp.zeros((Bt * T, H), jnp.float32)
    for h in range(num_heads):
        qs = q3[:, :, h * hd:(h + 1) * hd].astype(jnp.bfloat16)          # (Bt,T,hd)
        ks = kv3[:, :, h * hd:(h + 1) * hd].astype(jnp.bfloat16)
        vs = kv3[:, :, H + h * hd:H + (h + 1) * hd].astype(jnp.bfloat16)
        s = jnp.einsum('bqd,bkd->bqk', qs, ks,
                       preferred_element_type=jnp.float32)               # (Bt,T,T)
        s = jnp.where(causal, s, -1e30)
        s = s - jnp.max(s, axis=-1, keepdims=True)
        p = jnp.exp(s)
        p = p * pl.reciprocal(jnp.sum(p, axis=-1, keepdims=True), approx=True)
        o = jnp.einsum('bqk,bkd->bqd', p.astype(jnp.bfloat16), vs,
                       preferred_element_type=jnp.float32)               # (Bt,T,hd)
        # out-projection accumulated per head (sublane slice of W_out; no concat)
        acc = acc + jnp.dot(o.reshape(Bt * T, hd).astype(jnp.bfloat16),
                            w_out[h * hd:(h + 1) * hd, :],
                            preferred_element_type=jnp.float32)
    attn = acc + bo_ref[0]
    x = q_in + attn

    # ---- pointwise feed-forward (kernel_size=1 convs == matmuls) ----
    x = _layernorm(x, ffn_ln_g_ref[0], ffn_ln_b_ref[0])
    h1 = jnp.maximum(
        jnp.dot(x.astype(jnp.bfloat16), conv1_w_ref[0],
                preferred_element_type=jnp.float32) + conv1_b_ref[0], 0.0)
    h2 = (jnp.dot(h1.astype(jnp.bfloat16), conv2_w_ref[0],
                  preferred_element_type=jnp.float32) + conv2_b_ref[0])
    x = x + h2
    x_scr[...] = x

    # ---- final layernorm + pos/neg logits (last layer only, lane-dense (Bt, T)) ----
    @pl.when(layer == num_layers - 1)
    def _():
        feats = _layernorm(x, last_ln_g_ref[...], last_ln_b_ref[...])    # (Bt*T, H)
        feats3 = feats.reshape(Bt, T, H)
        pos_out_ref[...] = jnp.sum(feats3 * pos_emb_ref[...], axis=-1)
        neg_out_ref[...] = jnp.sum(feats3 * neg_emb_ref[...], axis=-1)


def sasrec_forward(params, log_seqs, pos_seqs, neg_seqs, num_heads, block_b=None):
    """SASRec.forward (user_ids unused, as in the reference module)."""
    item_tab = params["item_emb"]
    pos_tab = params["pos_emb"]
    B, T = log_seqs.shape
    H = item_tab.shape[1]
    L = params["in_proj_w"].shape[0]

    if block_b is None:
        block_b = B
    assert B % block_b == 0
    nb = B // block_b

    # --- glue: embedding gathers (padding_idx=0 rows are zero) ---
    seq_item = jnp.take(item_tab, log_seqs, axis=0)                          # (B,T,H)
    poss = jnp.arange(1, T + 1, dtype=jnp.int32)[None, :] * (log_seqs != 0).astype(jnp.int32)
    seq_pos = jnp.take(pos_tab, poss, axis=0)                                # (B,T,H)
    pos_embs = jnp.take(item_tab, pos_seqs, axis=0)                          # (B,T,H)
    neg_embs = jnp.take(item_tab, neg_seqs, axis=0)                          # (B,T,H)

    # pre-transpose weights (kernel computes x @ W) and pre-cast to bf16 for the MXU
    in_proj_wT = jnp.transpose(params["in_proj_w"], (0, 2, 1))               # (L,H,3H)
    wq = in_proj_wT[:, :, :H].astype(jnp.bfloat16)                           # (L,H,H)
    wkv = in_proj_wT[:, :, H:].astype(jnp.bfloat16)                          # (L,H,2H) fused K|V
    wo = jnp.transpose(params["out_proj_w"], (0, 2, 1)).astype(jnp.bfloat16)
    conv1_wT = jnp.transpose(params["conv1_w"], (0, 2, 1)).astype(jnp.bfloat16)
    conv2_wT = jnp.transpose(params["conv2_w"], (0, 2, 1)).astype(jnp.bfloat16)

    def as3d(a):   # (L, D) -> (L, 1, D) so per-layer blocks satisfy tiling rules
        return a.reshape(a.shape[0], 1, a.shape[1])

    inputs = [seq_item, seq_pos, pos_embs, neg_embs,
              as3d(params["attn_ln_g"]), as3d(params["attn_ln_b"]),
              wq, as3d(params["in_proj_b"][:, :H]),
              wkv, as3d(params["in_proj_b"][:, H:]),
              wo, as3d(params["out_proj_b"]),
              as3d(params["ffn_ln_g"]), as3d(params["ffn_ln_b"]),
              conv1_wT, as3d(params["conv1_b"]),
              conv2_wT, as3d(params["conv2_b"]),
              params["last_ln_g"].reshape(1, H), params["last_ln_b"].reshape(1, H)]

    seq_spec = pl.BlockSpec((block_b, T, H), lambda b, l: (b, 0, 0))

    def per_layer_spec(a):
        nd = a.ndim
        return pl.BlockSpec((1,) + a.shape[1:],
                            lambda b, l, _nd=nd: (l,) + (0,) * (_nd - 1))

    def const_spec(a):
        nd = a.ndim
        return pl.BlockSpec(a.shape, lambda b, l, _nd=nd: (0,) * _nd)

    in_specs = ([seq_spec] * 4
                + [per_layer_spec(a) for a in inputs[4:18]]
                + [const_spec(inputs[18]), const_spec(inputs[19])])

    out_shape = (jax.ShapeDtypeStruct((B, T), jnp.float32),
                 jax.ShapeDtypeStruct((B, T), jnp.float32))
    out_specs = (pl.BlockSpec((block_b, T), lambda b, l: (b, 0)),
                 pl.BlockSpec((block_b, T), lambda b, l: (b, 0)))

    kernel = functools.partial(sasrec_kernel, num_heads)
    pos_l, neg_l = pl.pallas_call(
        kernel,
        out_shape=out_shape,
        grid=(nb, L),
        in_specs=in_specs,
        out_specs=out_specs,
        scratch_shapes=[pltpu.VMEM((block_b * T, H), jnp.float32)],
        compiler_params=pltpu.CompilerParams(
            dimension_semantics=("parallel", "arbitrary")),
    )(*inputs)
    return pos_l, neg_l


def ref_forward(params, log_seqs, pos_seqs, neg_seqs, num_heads):
    """Pure-JAX reference of the same math (for correctness check)."""
    item_tab = params["item_emb"]
    pos_tab = params["pos_emb"]
    B, T = log_seqs.shape
    H = item_tab.shape[1]
    L = params["in_proj_w"].shape[0]
    hd = H // num_heads

    def ln(x, g, b, eps=1e-8):
        m = x.mean(-1, keepdims=True)
        v = ((x - m) ** 2).mean(-1, keepdims=True)
        return (x - m) / jnp.sqrt(v + eps) * g + b

    x = jnp.take(item_tab, log_seqs, axis=0) * math.sqrt(H)
    poss = jnp.arange(1, T + 1, dtype=jnp.int32)[None, :] * (log_seqs != 0).astype(jnp.int32)
    x = x + jnp.take(pos_tab, poss, axis=0)
    mask = jnp.tril(jnp.ones((T, T), dtype=bool))
    for l in range(L):
        qn = ln(x, params["attn_ln_g"][l], params["attn_ln_b"][l])
        w = params["in_proj_w"][l]
        bi = params["in_proj_b"][l]
        q = qn @ w[:H].T + bi[:H]
        k = x @ w[H:2 * H].T + bi[H:2 * H]
        v = x @ w[2 * H:].T + bi[2 * H:]
        q = q.reshape(B, T, num_heads, hd).transpose(0, 2, 1, 3)
        k = k.reshape(B, T, num_heads, hd).transpose(0, 2, 1, 3)
        v = v.reshape(B, T, num_heads, hd).transpose(0, 2, 1, 3)
        s = jnp.einsum("bhqd,bhkd->bhqk", q, k) / math.sqrt(hd)
        s = jnp.where(mask, s, -jnp.inf)
        p = jax.nn.softmax(s, axis=-1)
        a = jnp.einsum("bhqk,bhkd->bhqd", p, v).transpose(0, 2, 1, 3).reshape(B, T, H)
        a = a @ params["out_proj_w"][l].T + params["out_proj_b"][l]
        x = qn + a
        x = ln(x, params["ffn_ln_g"][l], params["ffn_ln_b"][l])
        h1 = jnp.maximum(x @ params["conv1_w"][l].T + params["conv1_b"][l], 0.0)
        x = x + (h1 @ params["conv2_w"][l].T + params["conv2_b"][l])
    feats = ln(x, params["last_ln_g"], params["last_ln_b"])
    pos = jnp.sum(feats * jnp.take(item_tab, pos_seqs, axis=0), -1)
    neg = jnp.sum(feats * jnp.take(item_tab, neg_seqs, axis=0), -1)
    return pos, neg


def init_params(key, item_num, maxlen, H, L):
    ks = jax.random.split(key, 10)

    def nrm(k, shape, s=0.02):
        return jax.random.normal(k, shape, jnp.float32) * s

    item_emb = nrm(ks[0], (item_num + 1, H)).at[0].set(0.0)   # padding_idx=0
    pos_emb = nrm(ks[1], (maxlen + 1, H)).at[0].set(0.0)      # padding_idx=0
    return dict(
        item_emb=item_emb,
        pos_emb=pos_emb,
        attn_ln_g=jnp.ones((L, H), jnp.float32),
        attn_ln_b=jnp.zeros((L, H), jnp.float32),
        in_proj_w=nrm(ks[2], (L, 3 * H, H)),
        in_proj_b=nrm(ks[3], (L, 3 * H)),
        out_proj_w=nrm(ks[4], (L, H, H)),
        out_proj_b=nrm(ks[5], (L, H)),
        ffn_ln_g=jnp.ones((L, H), jnp.float32),
        ffn_ln_b=jnp.zeros((L, H), jnp.float32),
        conv1_w=nrm(ks[6], (L, H, H)),
        conv1_b=nrm(ks[7], (L, H)),
        conv2_w=nrm(ks[8], (L, H, H)),
        conv2_b=nrm(ks[9], (L, H)),
        last_ln_g=jnp.ones((H,), jnp.float32),
        last_ln_b=jnp.zeros((H,), jnp.float32),
    )


if __name__ == "__main__":
    item_num, maxlen, H, L, nh = 100, 8, 32, 2, 2
    B, T = 2, maxlen

    key = jax.random.PRNGKey(0)
    kp, k1, k2, k3 = jax.random.split(key, 4)
    params = init_params(kp, item_num, maxlen, H, L)

    log_seqs = jax.random.randint(k1, (B, T), 0, item_num + 1, dtype=jnp.int32)
    log_seqs = log_seqs.at[:, :2].set(0)  # leading padding like real SASRec batches
    pos_seqs = jax.random.randint(k2, (B, T), 1, item_num + 1, dtype=jnp.int32)
    neg_seqs = jax.random.randint(k3, (B, T), 1, item_num + 1, dtype=jnp.int32)

    pos_logits, neg_logits = sasrec_forward(params, log_seqs, pos_seqs, neg_seqs, nh)
    jax.block_until_ready((pos_logits, neg_logits))

    ref_p, ref_n = ref_forward(params, log_seqs, pos_seqs, neg_seqs, nh)
    assert pos_logits.shape == (B, T) and neg_logits.shape == (B, T)
    # bf16 matmul inputs (f32 accumulation) => slightly looser tolerance vs f32 ref
    assert jnp.allclose(pos_logits, ref_p, atol=2e-2, rtol=2e-2)
    assert jnp.allclose(neg_logits, ref_n, atol=2e-2, rtol=2e-2)
    print("KERNEL_OK")
</pallas_src>

<mosaic_0001>
module attributes {stable_mosaic.version = 11 : i64} {
  func.func @sasrec_kernel(%arg0: i32, %arg1: i32, %arg2: memref<2x8x32xf32, #tpu.memory_space<vmem>>, %arg3: memref<2x8x32xf32, #tpu.memory_space<vmem>>, %arg4: memref<2x8x32xf32, #tpu.memory_space<vmem>>, %arg5: memref<2x8x32xf32, #tpu.memory_space<vmem>>, %arg6: memref<1x1x32xf32, #tpu.memory_space<vmem>>, %arg7: memref<1x1x32xf32, #tpu.memory_space<vmem>>, %arg8: memref<1x32x32xbf16, #tpu.memory_space<vmem>>, %arg9: memref<1x1x32xf32, #tpu.memory_space<vmem>>, %arg10: memref<1x32x64xbf16, #tpu.memory_space<vmem>>, %arg11: memref<1x1x64xf32, #tpu.memory_space<vmem>>, %arg12: memref<1x32x32xbf16, #tpu.memory_space<vmem>>, %arg13: memref<1x1x32xf32, #tpu.memory_space<vmem>>, %arg14: memref<1x1x32xf32, #tpu.memory_space<vmem>>, %arg15: memref<1x1x32xf32, #tpu.memory_space<vmem>>, %arg16: memref<1x32x32xbf16, #tpu.memory_space<vmem>>, %arg17: memref<1x1x32xf32, #tpu.memory_space<vmem>>, %arg18: memref<1x32x32xbf16, #tpu.memory_space<vmem>>, %arg19: memref<1x1x32xf32, #tpu.memory_space<vmem>>, %arg20: memref<1x32xf32, #tpu.memory_space<vmem>>, %arg21: memref<1x32xf32, #tpu.memory_space<vmem>>, %arg22: memref<2x8xf32, #tpu.memory_space<vmem>>, %arg23: memref<2x8xf32, #tpu.memory_space<vmem>>, %arg24: memref<16x32xf32, #tpu.memory_space<vmem>>) attributes {dimension_semantics = [#tpu.dimension_semantics<parallel>, #tpu.dimension_semantics<arbitrary>], iteration_bounds = array<i64: 1, 2>, scalar_prefetch = 0 : i64, scratch_operands = 1 : i64, tpu.core_type = #tpu.core_type<tc>, window_params = [{transform_indices = @transform_0, window_bounds = array<i64: 2, 8, 32>}, {transform_indices = @transform_1, window_bounds = array<i64: 2, 8, 32>}, {transform_indices = @transform_2, window_bounds = array<i64: 2, 8, 32>}, {transform_indices = @transform_3, window_bounds = array<i64: 2, 8, 32>}, {transform_indices = @transform_4, window_bounds = array<i64: 1, 1, 32>}, {transform_indices = @transform_5, window_bounds = array<i64: 1, 1, 32>}, {transform_indices = @transform_6, window_bounds = array<i64: 1, 32, 32>}, {transform_indices = @transform_7, window_bounds = array<i64: 1, 1, 32>}, {transform_indices = @transform_8, window_bounds = array<i64: 1, 32, 64>}, {transform_indices = @transform_9, window_bounds = array<i64: 1, 1, 64>}, {transform_indices = @transform_10, window_bounds = array<i64: 1, 32, 32>}, {transform_indices = @transform_11, window_bounds = array<i64: 1, 1, 32>}, {transform_indices = @transform_12, window_bounds = array<i64: 1, 1, 32>}, {transform_indices = @transform_13, window_bounds = array<i64: 1, 1, 32>}, {transform_indices = @transform_14, window_bounds = array<i64: 1, 32, 32>}, {transform_indices = @transform_15, window_bounds = array<i64: 1, 1, 32>}, {transform_indices = @transform_16, window_bounds = array<i64: 1, 32, 32>}, {transform_indices = @transform_17, window_bounds = array<i64: 1, 1, 32>}, {pipeline_mode = #tpu.pipeline_mode<synchronous>, transform_indices = @transform_18, window_bounds = array<i64: 1, 32>}, {pipeline_mode = #tpu.pipeline_mode<synchronous>, transform_indices = @transform_19, window_bounds = array<i64: 1, 32>}, {transform_indices = @transform_20, window_bounds = array<i64: 2, 8>}, {transform_indices = @transform_21, window_bounds = array<i64: 2, 8>}]} {
    %c0_i32 = arith.constant 0 : i32
    %0 = arith.cmpi eq, %arg1, %c0_i32 : i32
    %1 = arith.extui %0 : i1 to i32
    %c0_i32_0 = arith.constant 0 : i32
    %2 = arith.cmpi ne, %1, %c0_i32_0 : i32
    scf.if %2 {
      %c0_75 = arith.constant 0 : index
      %c0_76 = arith.constant 0 : index
      %c0_77 = arith.constant 0 : index
      %167 = vector.load %arg2[%c0_75, %c0_76, %c0_77] : memref<2x8x32xf32, #tpu.memory_space<vmem>>, vector<2x8x32xf32>
      %cst_78 = arith.constant 5.65685415 : f32
      %168 = vector.broadcast %cst_78 : f32 to vector<2x8x32xf32>
      %169 = arith.mulf %167, %168 : vector<2x8x32xf32>
      %c0_79 = arith.constant 0 : index
      %c0_80 = arith.constant 0 : index
      %c0_81 = arith.constant 0 : index
      %170 = vector.load %arg3[%c0_79, %c0_80, %c0_81] : memref<2x8x32xf32, #tpu.memory_space<vmem>>, vector<2x8x32xf32>
      %171 = arith.addf %169, %170 : vector<2x8x32xf32>
      %172 = vector.shape_cast %171 : vector<2x8x32xf32> to vector<16x32xf32>
      %c0_82 = arith.constant 0 : index
      %c0_83 = arith.constant 0 : index
      %173 = vector.load %arg24[%c0_82, %c0_83] : memref<16x32xf32, #tpu.memory_space<vmem>>, vector<16x32xf32>
      tpu.vector_store %arg24[%c0_82, %c0_83], %172 {strides = array<i32>} : memref<16x32xf32, #tpu.memory_space<vmem>>, vector<16x32xf32>,
    } else {
    }
    %c0 = arith.constant 0 : index
    %c0_1 = arith.constant 0 : index
    %3 = vector.load %arg24[%c0, %c0_1] : memref<16x32xf32, #tpu.memory_space<vmem>>, vector<16x32xf32>
    %4 = tpu.iota {dimensions = array<i32: 0>} : vector<8x8xi32>
    %5 = tpu.iota {dimensions = array<i32: 1>} : vector<8x8xi32>
    %6 = arith.cmpi sle, %5, %4 : vector<8x8xi32>
    %7 = vector.shape_cast %6 : vector<8x8xi1> to vector<1x8x8xi1>
    %c0_2 = arith.constant 0 : index
    %c0_3 = arith.constant 0 : index
    %c0_4 = arith.constant 0 : index
    %8 = vector.load %arg6[%c0_2, %c0_3, %c0_4] : memref<1x1x32xf32, #tpu.memory_space<vmem>>, vector<1x1x32xf32>
    %9 = vector.shape_cast %8 : vector<1x1x32xf32> to vector<1x32xf32>
    %c0_5 = arith.constant 0 : index
    %c0_6 = arith.constant 0 : index
    %c0_7 = arith.constant 0 : index
    %10 = vector.load %arg7[%c0_5, %c0_6, %c0_7] : memref<1x1x32xf32, #tpu.memory_space<vmem>>, vector<1x1x32xf32>
    %11 = vector.shape_cast %10 : vector<1x1x32xf32> to vector<1x32xf32>
    %cst = arith.constant dense<0.000000e+00> : vector<16xf32>
    %12 = vector.multi_reduction <add>, %3, %cst [1] : vector<16x32xf32> to vector<16xf32>
    %13 = vector.shape_cast %12 : vector<16xf32> to vector<16x1xf32>
    %cst_8 = arith.constant 3.200000e+01 : f32
    %14 = vector.broadcast %cst_8 : f32 to vector<16x1xf32>
    %15 = arith.divf %13, %14 : vector<16x1xf32>
    %16 = vector.broadcast %15 : vector<16x1xf32> to vector<16x32xf32>
    %17 = arith.subf %3, %16 : vector<16x32xf32>
    %18 = arith.mulf %17, %17 : vector<16x32xf32>
    %cst_9 = arith.constant dense<0.000000e+00> : vector<16xf32>
    %19 = vector.multi_reduction <add>, %18, %cst_9 [1] : vector<16x32xf32> to vector<16xf32>
    %20 = vector.shape_cast %19 : vector<16xf32> to vector<16x1xf32>
    %cst_10 = arith.constant 3.200000e+01 : f32
    %21 = vector.broadcast %cst_10 : f32 to vector<16x1xf32>
    %22 = arith.divf %20, %21 : vector<16x1xf32>
    %23 = vector.broadcast %15 : vector<16x1xf32> to vector<16x32xf32>
    %24 = arith.subf %3, %23 : vector<16x32xf32>
    %cst_11 = arith.constant 9.99999993E-9 : f32
    %25 = vector.broadcast %cst_11 : f32 to vector<16x1xf32>
    %26 = arith.addf %22, %25 : vector<16x1xf32>
    %27 = math.rsqrt %26 : vector<16x1xf32>
    %28 = vector.broadcast %27 : vector<16x1xf32> to vector<16x32xf32>
    %29 = arith.mulf %24, %28 : vector<16x32xf32>
    %30 = vector.broadcast %9 : vector<1x32xf32> to vector<16x32xf32>
    %31 = arith.mulf %29, %30 : vector<16x32xf32>
    %32 = vector.broadcast %11 : vector<1x32xf32> to vector<16x32xf32>
    %33 = arith.addf %31, %32 : vector<16x32xf32>
    %34 = arith.truncf %33 : vector<16x32xf32> to vector<16x32xbf16>
    %c0_12 = arith.constant 0 : index
    %c0_13 = arith.constant 0 : index
    %c0_14 = arith.constant 0 : index
    %35 = vector.load %arg8[%c0_12, %c0_13, %c0_14] : memref<1x32x32xbf16, #tpu.memory_space<vmem>>, vector<1x32x32xbf16>
    %36 = vector.shape_cast %35 : vector<1x32x32xbf16> to vector<32x32xbf16>
    %cst_15 = arith.constant dense<0.000000e+00> : vector<16x32xf32>
    %37 = tpu.matmul %34, %36, %cst_15 {dimension_numbers = #tpu.dot_dimension_numbers<[1], [0], [0], [1], [0, 0, 1, 1], [], []>} : vector<16x32xbf16>, vector<32x32xbf16>, vector<16x32xf32> -> vector<16x32xf32>
    %c0_16 = arith.constant 0 : index
    %c0_17 = arith.constant 0 : index
    %c0_18 = arith.constant 0 : index
    %38 = vector.load %arg9[%c0_16, %c0_17, %c0_18] : memref<1x1x32xf32, #tpu.memory_space<vmem>>, vector<1x1x32xf32>
    %39 = vector.shape_cast %38 : vector<1x1x32xf32> to vector<1x32xf32>
    %40 = vector.broadcast %39 : vector<1x32xf32> to vector<16x32xf32>
    %41 = arith.addf %37, %40 : vector<16x32xf32>
    %42 = arith.truncf %3 : vector<16x32xf32> to vector<16x32xbf16>
    %c0_19 = arith.constant 0 : index
    %c0_20 = arith.constant 0 : index
    %c0_21 = arith.constant 0 : index
    %43 = vector.load %arg10[%c0_19, %c0_20, %c0_21] : memref<1x32x64xbf16, #tpu.memory_space<vmem>>, vector<1x32x64xbf16>
    %44 = vector.shape_cast %43 : vector<1x32x64xbf16> to vector<32x64xbf16>
    %cst_22 = arith.constant dense<0.000000e+00> : vector<16x64xf32>
    %45 = tpu.matmul %42, %44, %cst_22 {dimension_numbers = #tpu.dot_dimension_numbers<[1], [0], [0], [1], [0, 0, 1, 1], [], []>} : vector<16x32xbf16>, vector<32x64xbf16>, vector<16x64xf32> -> vector<16x64xf32>
    %c0_23 = arith.constant 0 : index
    %c0_24 = arith.constant 0 : index
    %c0_25 = arith.constant 0 : index
    %46 = vector.load %arg11[%c0_23, %c0_24, %c0_25] : memref<1x1x64xf32, #tpu.memory_space<vmem>>, vector<1x1x64xf32>
    %47 = vector.shape_cast %46 : vector<1x1x64xf32> to vector<1x64xf32>
    %48 = vector.broadcast %47 : vector<1x64xf32> to vector<16x64xf32>
    %49 = arith.addf %45, %48 : vector<16x64xf32>
    %cst_26 = arith.constant 2.500000e-01 : f32
    %50 = vector.broadcast %cst_26 : f32 to vector<16x32xf32>
    %51 = arith.mulf %41, %50 : vector<16x32xf32>
    %52 = vector.shape_cast %51 : vector<16x32xf32> to vector<2x8x32xf32>
    %53 = vector.shape_cast %49 : vector<16x64xf32> to vector<2x8x64xf32>
    %c0_27 = arith.constant 0 : index
    %c0_28 = arith.constant 0 : index
    %c0_29 = arith.constant 0 : index
    %54 = vector.load %arg12[%c0_27, %c0_28, %c0_29] : memref<1x32x32xbf16, #tpu.memory_space<vmem>>, vector<1x32x32xbf16>
    %55 = vector.shape_cast %54 : vector<1x32x32xbf16> to vector<32x32xbf16>
    %cst_30 = arith.constant 0.000000e+00 : f32
    %56 = vector.broadcast %cst_30 : f32 to vector<16x32xf32>
    %57 = vector.extract_strided_slice %52 {offsets = [0, 0, 0], sizes = [2, 8, 16], strides = [1, 1, 1]} : vector<2x8x32xf32> to vector<2x8x16xf32>
    %58 = arith.truncf %57 : vector<2x8x16xf32> to vector<2x8x16xbf16>
    %59 = vector.extract_strided_slice %53 {offsets = [0, 0, 0], sizes = [2, 8, 16], strides = [1, 1, 1]} : vector<2x8x64xf32> to vector<2x8x16xf32>
    %60 = arith.truncf %59 : vector<2x8x16xf32> to vector<2x8x16xbf16>
    %61 = vector.extract_strided_slice %53 {offsets = [0, 0, 32], sizes = [2, 8, 16], strides = [1, 1, 1]} : vector<2x8x64xf32> to vector<2x8x16xf32>
    %62 = arith.truncf %61 : vector<2x8x16xf32> to vector<2x8x16xbf16>
    "tpu.trace_start"() <{level = 10 : i32, message = "bqd,bkd->bqk"}> : () -> ()
    %cst_31 = arith.constant dense<0.000000e+00> : vector<2x8x8xf32>
    %63 = tpu.matmul %58, %60, %cst_31 {dimension_numbers = #tpu.dot_dimension_numbers<[2], [2], [1], [1], [0, 0, 0, 1, 1, 1], [0], [0]>} : vector<2x8x16xbf16>, vector<2x8x16xbf16>, vector<2x8x8xf32> -> vector<2x8x8xf32>
    %cst_32 = arith.constant -1.000000e+30 : f32
    "tpu.trace_stop"() : () -> ()
    %64 = vector.shape_cast %7 : vector<1x8x8xi1> to vector<1x8x8xi1>
    %65 = vector.broadcast %64 : vector<1x8x8xi1> to vector<2x8x8xi1>
    %66 = vector.broadcast %cst_32 : f32 to vector<2x8x8xf32>
    %67 = arith.select %65, %63, %66 : vector<2x8x8xi1>, vector<2x8x8xf32>
    %cst_33 = arith.constant dense<0xFF800000> : vector<2x8xf32>
    %68 = vector.multi_reduction <maximumf>, %67, %cst_33 [2] : vector<2x8x8xf32> to vector<2x8xf32>
    %69 = vector.shape_cast %68 : vector<2x8xf32> to vector<2x8x1xf32>
    %70 = vector.broadcast %69 : vector<2x8x1xf32> to vector<2x8x8xf32>
    %71 = arith.subf %67, %70 : vector<2x8x8xf32>
    %72 = math.exp %71 : vector<2x8x8xf32>
    %cst_34 = arith.constant dense<0.000000e+00> : vector<2x8xf32>
    %73 = vector.multi_reduction <add>, %72, %cst_34 [2] : vector<2x8x8xf32> to vector<2x8xf32>
    %74 = vector.shape_cast %73 : vector<2x8xf32> to vector<2x8x1xf32>
    %75 = tpu.reciprocal %74 {approx = true} : vector<2x8x1xf32> -> vector<2x8x1xf32>
    %76 = vector.broadcast %75 : vector<2x8x1xf32> to vector<2x8x8xf32>
    %77 = arith.mulf %72, %76 : vector<2x8x8xf32>
    %78 = arith.truncf %77 : vector<2x8x8xf32> to vector<2x8x8xbf16>
    "tpu.trace_start"() <{level = 10 : i32, message = "bqk,bkd->bqd"}> : () -> ()
    %cst_35 = arith.constant dense<0.000000e+00> : vector<2x8x16xf32>
    %79 = tpu.matmul %78, %62, %cst_35 {dimension_numbers = #tpu.dot_dimension_numbers<[2], [1], [1], [2], [0, 0, 0, 1, 1, 2], [0], [0]>} : vector<2x8x8xbf16>, vector<2x8x16xbf16>, vector<2x8x16xf32> -> vector<2x8x16xf32>
    "tpu.trace_stop"() : () -> ()
    %80 = vector.shape_cast %79 : vector<2x8x16xf32> to vector<16x16xf32>
    %81 = arith.truncf %80 : vector<16x16xf32> to vector<16x16xbf16>
    %82 = vector.extract_strided_slice %55 {offsets = [0, 0], sizes = [16, 32], strides = [1, 1]} : vector<32x32xbf16> to vector<16x32xbf16>
    %cst_36 = arith.constant dense<0.000000e+00> : vector<16x32xf32>
    %83 = tpu.matmul %81, %82, %cst_36 {dimension_numbers = #tpu.dot_dimension_numbers<[1], [0], [0], [1], [0, 0, 1, 1], [], []>} : vector<16x16xbf16>, vector<16x32xbf16>, vector<16x32xf32> -> vector<16x32xf32>
    %84 = arith.addf %56, %83 : vector<16x32xf32>
    %85 = vector.extract_strided_slice %52 {offsets = [0, 0, 16], sizes = [2, 8, 16], strides = [1, 1, 1]} : vector<2x8x32xf32> to vector<2x8x16xf32>
    %86 = arith.truncf %85 : vector<2x8x16xf32> to vector<2x8x16xbf16>
    %87 = vector.extract_strided_slice %53 {offsets = [0, 0, 16], sizes = [2, 8, 16], strides = [1, 1, 1]} : vector<2x8x64xf32> to vector<2x8x16xf32>
    %88 = arith.truncf %87 : vector<2x8x16xf32> to vector<2x8x16xbf16>
    %89 = vector.extract_strided_slice %53 {offsets = [0, 0, 48], sizes = [2, 8, 16], strides = [1, 1, 1]} : vector<2x8x64xf32> to vector<2x8x16xf32>
    %90 = arith.truncf %89 : vector<2x8x16xf32> to vector<2x8x16xbf16>
    "tpu.trace_start"() <{level = 10 : i32, message = "bqd,bkd->bqk"}> : () -> ()
    %cst_37 = arith.constant dense<0.000000e+00> : vector<2x8x8xf32>
    %91 = tpu.matmul %86, %88, %cst_37 {dimension_numbers = #tpu.dot_dimension_numbers<[2], [2], [1], [1], [0, 0, 0, 1, 1, 1], [0], [0]>} : vector<2x8x16xbf16>, vector<2x8x16xbf16>, vector<2x8x8xf32> -> vector<2x8x8xf32>
    %cst_38 = arith.constant -1.000000e+30 : f32
    "tpu.trace_stop"() : () -> ()
    %92 = vector.shape_cast %7 : vector<1x8x8xi1> to vector<1x8x8xi1>
    %93 = vector.broadcast %92 : vector<1x8x8xi1> to vector<2x8x8xi1>
    %94 = vector.broadcast %cst_38 : f32 to vector<2x8x8xf32>
    %95 = arith.select %93, %91, %94 : vector<2x8x8xi1>, vector<2x8x8xf32>
    %cst_39 = arith.constant dense<0xFF800000> : vector<2x8xf32>
    %96 = vector.multi_reduction <maximumf>, %95, %cst_39 [2] : vector<2x8x8xf32> to vector<2x8xf32>
    %97 = vector.shape_cast %96 : vector<2x8xf32> to vector<2x8x1xf32>
    %98 = vector.broadcast %97 : vector<2x8x1xf32> to vector<2x8x8xf32>
    %99 = arith.subf %95, %98 : vector<2x8x8xf32>
    %100 = math.exp %99 : vector<2x8x8xf32>
    %cst_40 = arith.constant dense<0.000000e+00> : vector<2x8xf32>
    %101 = vector.multi_reduction <add>, %100, %cst_40 [2] : vector<2x8x8xf32> to vector<2x8xf32>
    %102 = vector.shape_cast %101 : vector<2x8xf32> to vector<2x8x1xf32>
    %103 = tpu.reciprocal %102 {approx = true} : vector<2x8x1xf32> -> vector<2x8x1xf32>
    %104 = vector.broadcast %103 : vector<2x8x1xf32> to vector<2x8x8xf32>
    %105 = arith.mulf %100, %104 : vector<2x8x8xf32>
    %106 = arith.truncf %105 : vector<2x8x8xf32> to vector<2x8x8xbf16>
    "tpu.trace_start"() <{level = 10 : i32, message = "bqk,bkd->bqd"}> : () -> ()
    %cst_41 = arith.constant dense<0.000000e+00> : vector<2x8x16xf32>
    %107 = tpu.matmul %106, %90, %cst_41 {dimension_numbers = #tpu.dot_dimension_numbers<[2], [1], [1], [2], [0, 0, 0, 1, 1, 2], [0], [0]>} : vector<2x8x8xbf16>, vector<2x8x16xbf16>, vector<2x8x16xf32> -> vector<2x8x16xf32>
    "tpu.trace_stop"() : () -> ()
    %108 = vector.shape_cast %107 : vector<2x8x16xf32> to vector<16x16xf32>
    %109 = arith.truncf %108 : vector<16x16xf32> to vector<16x16xbf16>
    %110 = vector.extract_strided_slice %55 {offsets = [16, 0], sizes = [16, 32], strides = [1, 1]} : vector<32x32xbf16> to vector<16x32xbf16>
    %cst_42 = arith.constant dense<0.000000e+00> : vector<16x32xf32>
    %111 = tpu.matmul %109, %110, %cst_42 {dimension_numbers = #tpu.dot_dimension_numbers<[1], [0], [0], [1], [0, 0, 1, 1], [], []>} : vector<16x16xbf16>, vector<16x32xbf16>, vector<16x32xf32> -> vector<16x32xf32>
    %112 = arith.addf %84, %111 : vector<16x32xf32>
    %c0_43 = arith.constant 0 : index
    %c0_44 = arith.constant 0 : index
    %c0_45 = arith.constant 0 : index
    %113 = vector.load %arg13[%c0_43, %c0_44, %c0_45] : memref<1x1x32xf32, #tpu.memory_space<vmem>>, vector<1x1x32xf32>
    %114 = vector.shape_cast %113 : vector<1x1x32xf32> to vector<1x32xf32>
    %115 = vector.broadcast %114 : vector<1x32xf32> to vector<16x32xf32>
    %116 = arith.addf %112, %115 : vector<16x32xf32>
    %117 = arith.addf %33, %116 : vector<16x32xf32>
    %c0_46 = arith.constant 0 : index
    %c0_47 = arith.constant 0 : index
    %c0_48 = arith.constant 0 : index
    %118 = vector.load %arg14[%c0_46, %c0_47, %c0_48] : memref<1x1x32xf32, #tpu.memory_space<vmem>>, vector<1x1x32xf32>
    %119 = vector.shape_cast %118 : vector<1x1x32xf32> to vector<1x32xf32>
    %c0_49 = arith.constant 0 : index
    %c0_50 = arith.constant 0 : index
    %c0_51 = arith.constant 0 : index
    %120 = vector.load %arg15[%c0_49, %c0_50, %c0_51] : memref<1x1x32xf32, #tpu.memory_space<vmem>>, vector<1x1x32xf32>
    %121 = vector.shape_cast %120 : vector<1x1x32xf32> to vector<1x32xf32>
    %cst_52 = arith.constant dense<0.000000e+00> : vector<16xf32>
    %122 = vector.multi_reduction <add>, %117, %cst_52 [1] : vector<16x32xf32> to vector<16xf32>
    %123 = vector.shape_cast %122 : vector<16xf32> to vector<16x1xf32>
    %cst_53 = arith.constant 3.200000e+01 : f32
    %124 = vector.broadcast %cst_53 : f32 to vector<16x1xf32>
    %125 = arith.divf %123, %124 : vector<16x1xf32>
    %126 = vector.broadcast %125 : vector<16x1xf32> to vector<16x32xf32>
    %127 = arith.subf %117, %126 : vector<16x32xf32>
    %128 = arith.mulf %127, %127 : vector<16x32xf32>
    %cst_54 = arith.constant dense<0.000000e+00> : vector<16xf32>
    %129 = vector.multi_reduction <add>, %128, %cst_54 [1] : vector<16x32xf32> to vector<16xf32>
    %130 = vector.shape_cast %129 : vector<16xf32> to vector<16x1xf32>
    %cst_55 = arith.constant 3.200000e+01 : f32
    %131 = vector.broadcast %cst_55 : f32 to vector<16x1xf32>
    %132 = arith.divf %130, %131 : vector<16x1xf32>
    %133 = vector.broadcast %125 : vector<16x1xf32> to vector<16x32xf32>
    %134 = arith.subf %117, %133 : vector<16x32xf32>
    %cst_56 = arith.constant 9.99999993E-9 : f32
    %135 = vector.broadcast %cst_56 : f32 to vector<16x1xf32>
    %136 = arith.addf %132, %135 : vector<16x1xf32>
    %137 = math.rsqrt %136 : vector<16x1xf32>
    %138 = vector.broadcast %137 : vector<16x1xf32> to vector<16x32xf32>
    %139 = arith.mulf %134, %138 : vector<16x32xf32>
    %140 = vector.broadcast %119 : vector<1x32xf32> to vector<16x32xf32>
    %141 = arith.mulf %139, %140 : vector<16x32xf32>
    %142 = vector.broadcast %121 : vector<1x32xf32> to vector<16x32xf32>
    %143 = arith.addf %141, %142 : vector<16x32xf32>
    %144 = arith.truncf %143 : vector<16x32xf32> to vector<16x32xbf16>
    %c0_57 = arith.constant 0 : index
    %c0_58 = arith.constant 0 : index
    %c0_59 = arith.constant 0 : index
    %145 = vector.load %arg16[%c0_57, %c0_58, %c0_59] : memref<1x32x32xbf16, #tpu.memory_space<vmem>>, vector<1x32x32xbf16>
    %146 = vector.shape_cast %145 : vector<1x32x32xbf16> to vector<32x32xbf16>
    %cst_60 = arith.constant dense<0.000000e+00> : vector<16x32xf32>
    %147 = tpu.matmul %144, %146, %cst_60 {dimension_numbers = #tpu.dot_dimension_numbers<[1], [0], [0], [1], [0, 0, 1, 1], [], []>} : vector<16x32xbf16>, vector<32x32xbf16>, vector<16x32xf32> -> vector<16x32xf32>
    %c0_61 = arith.constant 0 : index
    %c0_62 = arith.constant 0 : index
    %c0_63 = arith.constant 0 : index
    %148 = vector.load %arg17[%c0_61, %c0_62, %c0_63] : memref<1x1x32xf32, #tpu.memory_space<vmem>>, vector<1x1x32xf32>
    %149 = vector.shape_cast %148 : vector<1x1x32xf32> to vector<1x32xf32>
    %150 = vector.broadcast %149 : vector<1x32xf32> to vector<16x32xf32>
    %151 = arith.addf %147, %150 : vector<16x32xf32>
    %cst_64 = arith.constant 0.000000e+00 : f32
    %152 = vector.broadcast %cst_64 : f32 to vector<16x32xf32>
    %153 = arith.maximumf %151, %152 : vector<16x32xf32>
    %154 = arith.truncf %153 : vector<16x32xf32> to vector<16x32xbf16>
    %c0_65 = arith.constant 0 : index
    %c0_66 = arith.constant 0 : index
    %c0_67 = arith.constant 0 : index
    %155 = vector.load %arg18[%c0_65, %c0_66, %c0_67] : memref<1x32x32xbf16, #tpu.memory_space<vmem>>, vector<1x32x32xbf16>
    %156 = vector.shape_cast %155 : vector<1x32x32xbf16> to vector<32x32xbf16>
    %cst_68 = arith.constant dense<0.000000e+00> : vector<16x32xf32>
    %157 = tpu.matmul %154, %156, %cst_68 {dimension_numbers = #tpu.dot_dimension_numbers<[1], [0], [0], [1], [0, 0, 1, 1], [], []>} : vector<16x32xbf16>, vector<32x32xbf16>, vector<16x32xf32> -> vector<16x32xf32>
    %c0_69 = arith.constant 0 : index
    %c0_70 = arith.constant 0 : index
    %c0_71 = arith.constant 0 : index
    %158 = vector.load %arg19[%c0_69, %c0_70, %c0_71] : memref<1x1x32xf32, #tpu.memory_space<vmem>>, vector<1x1x32xf32>
    %159 = vector.shape_cast %158 : vector<1x1x32xf32> to vector<1x32xf32>
    %160 = vector.broadcast %159 : vector<1x32xf32> to vector<16x32xf32>
    %161 = arith.addf %157, %160 : vector<16x32xf32>
    %162 = arith.addf %143, %161 : vector<16x32xf32>
    %c0_72 = arith.constant 0 : index
    %c0_73 = arith.constant 0 : index
    %163 = vector.load %arg24[%c0_72, %c0_73] : memref<16x32xf32, #tpu.memory_space<vmem>>, vector<16x32xf32>
    tpu.vector_store %arg24[%c0_72, %c0_73], %162 {strides = array<i32>} : memref<16x32xf32, #tpu.memory_space<vmem>>, vector<16x32xf32>,
    %c1_i32 = arith.constant 1 : i32
    %164 = arith.cmpi eq, %arg1, %c1_i32 : i32
    %165 = arith.extui %164 : i1 to i32
    %c0_i32_74 = arith.constant 0 : i32
    %166 = arith.cmpi ne, %165, %c0_i32_74 : i32
    scf.if %166 {
      %c0_75 = arith.constant 0 : index
      %c0_76 = arith.constant 0 : index
      %167 = vector.load %arg20[%c0_75, %c0_76] : memref<1x32xf32, #tpu.memory_space<vmem>>, vector<1x32xf32>
      %c0_77 = arith.constant 0 : index
      %c0_78 = arith.constant 0 : index
      %168 = vector.load %arg21[%c0_77, %c0_78] : memref<1x32xf32, #tpu.memory_space<vmem>>, vector<1x32xf32>
      %cst_79 = arith.constant dense<0.000000e+00> : vector<16xf32>
      %169 = vector.multi_reduction <add>, %162, %cst_79 [1] : vector<16x32xf32> to vector<16xf32>
      %170 = vector.shape_cast %169 : vector<16xf32> to vector<16x1xf32>
      %cst_80 = arith.constant 3.200000e+01 : f32
      %171 = vector.broadcast %cst_80 : f32 to vector<16x1xf32>
      %172 = arith.divf %170, %171 : vector<16x1xf32>
      %173 = vector.broadcast %172 : vector<16x1xf32> to vector<16x32xf32>
      %174 = arith.subf %162, %173 : vector<16x32xf32>
      %175 = arith.mulf %174, %174 : vector<16x32xf32>
      %cst_81 = arith.constant dense<0.000000e+00> : vector<16xf32>
      %176 = vector.multi_reduction <add>, %175, %cst_81 [1] : vector<16x32xf32> to vector<16xf32>
      %177 = vector.shape_cast %176 : vector<16xf32> to vector<16x1xf32>
      %cst_82 = arith.constant 3.200000e+01 : f32
      %178 = vector.broadcast %cst_82 : f32 to vector<16x1xf32>
      %179 = arith.divf %177, %178 : vector<16x1xf32>
      %180 = vector.broadcast %172 : vector<16x1xf32> to vector<16x32xf32>
      %181 = arith.subf %162, %180 : vector<16x32xf32>
      %cst_83 = arith.constant 9.99999993E-9 : f32
      %182 = vector.broadcast %cst_83 : f32 to vector<16x1xf32>
      %183 = arith.addf %179, %182 : vector<16x1xf32>
      %184 = math.rsqrt %183 : vector<16x1xf32>
      %185 = vector.broadcast %184 : vector<16x1xf32> to vector<16x32xf32>
      %186 = arith.mulf %181, %185 : vector<16x32xf32>
      %187 = vector.broadcast %167 : vector<1x32xf32> to vector<16x32xf32>
      %188 = arith.mulf %186, %187 : vector<16x32xf32>
      %189 = vector.broadcast %168 : vector<1x32xf32> to vector<16x32xf32>
      %190 = arith.addf %188, %189 : vector<16x32xf32>
      %191 = vector.shape_cast %190 : vector<16x32xf32> to vector<2x8x32xf32>
      %c0_84 = arith.constant 0 : index
      %c0_85 = arith.constant 0 : index
      %c0_86 = arith.constant 0 : index
      %192 = vector.load %arg4[%c0_84, %c0_85, %c0_86] : memref<2x8x32xf32, #tpu.memory_space<vmem>>, vector<2x8x32xf32>
      %193 = arith.mulf %191, %192 : vector<2x8x32xf32>
      %cst_87 = arith.constant dense<0.000000e+00> : vector<2x8xf32>
      %194 = vector.multi_reduction <add>, %193, %cst_87 [2] : vector<2x8x32xf32> to vector<2x8xf32>
      %c0_88 = arith.constant 0 : index
      %c0_89 = arith.constant 0 : index
      %195 = vector.load %arg22[%c0_88, %c0_89] : memref<2x8xf32, #tpu.memory_space<vmem>>, vector<2x8xf32>
      tpu.vector_store %arg22[%c0_88, %c0_89], %194 {strides = array<i32>} : memref<2x8xf32, #tpu.memory_space<vmem>>, vector<2x8xf32>,
      %c0_90 = arith.constant 0 : index
      %c0_91 = arith.constant 0 : index
      %c0_92 = arith.constant 0 : index
      %196 = vector.load %arg5[%c0_90, %c0_91, %c0_92] : memref<2x8x32xf32, #tpu.memory_space<vmem>>, vector<2x8x32xf32>
      %197 = arith.mulf %191, %196 : vector<2x8x32xf32>
      %cst_93 = arith.constant dense<0.000000e+00> : vector<2x8xf32>
      %198 = vector.multi_reduction <add>, %197, %cst_93 [2] : vector<2x8x32xf32> to vector<2x8xf32>
      %c0_94 = arith.constant 0 : index
      %c0_95 = arith.constant 0 : index
      %199 = vector.load %arg23[%c0_94, %c0_95] : memref<2x8xf32, #tpu.memory_space<vmem>>, vector<2x8xf32>
      tpu.vector_store %arg23[%c0_94, %c0_95], %198 {strides = array<i32>} : memref<2x8xf32, #tpu.memory_space<vmem>>, vector<2x8xf32>,
    } else {
    }
    return
  }
  func.func @transform_0(%arg0: i32, %arg1: i32) -> (i32, i32, i32) {
    %c0_i32 = arith.constant 0 : i32
    %c0_i32_0 = arith.constant 0 : i32
    %c0_i32_1 = arith.constant 0 : i32
    return %arg0, %c0_i32, %c0_i32_0 : i32, i32, i32
  }
  func.func @transform_1(%arg0: i32, %arg1: i32) -> (i32, i32, i32) {
    %c0_i32 = arith.constant 0 : i32
    %c0_i32_0 = arith.constant 0 : i32
    %c0_i32_1 = arith.constant 0 : i32
    return %arg0, %c0_i32, %c0_i32_0 : i32, i32, i32
  }
  func.func @transform_2(%arg0: i32, %arg1: i32) -> (i32, i32, i32) {
    %c0_i32 = arith.constant 0 : i32
    %c0_i32_0 = arith.constant 0 : i32
    %c0_i32_1 = arith.constant 0 : i32
    return %arg0, %c0_i32, %c0_i32_0 : i32, i32, i32
  }
  func.func @transform_3(%arg0: i32, %arg1: i32) -> (i32, i32, i32) {
    %c0_i32 = arith.constant 0 : i32
    %c0_i32_0 = arith.constant 0 : i32
    %c0_i32_1 = arith.constant 0 : i32
    return %arg0, %c0_i32, %c0_i32_0 : i32, i32, i32
  }
  func.func @transform_4(%arg0: i32, %arg1: i32) -> (i32, i32, i32) {
    %c0_i32 = arith.constant 0 : i32
    %c0_i32_0 = arith.constant 0 : i32
    %c0_i32_1 = arith.constant 0 : i32
    return %arg1, %c0_i32, %c0_i32_0 : i32, i32, i32
  }
  func.func @transform_5(%arg0: i32, %arg1: i32) -> (i32, i32, i32) {
    %c0_i32 = arith.constant 0 : i32
    %c0_i32_0 = arith.constant 0 : i32
    %c0_i32_1 = arith.constant 0 : i32
    return %arg1, %c0_i32, %c0_i32_0 : i32, i32, i32
  }
  func.func @transform_6(%arg0: i32, %arg1: i32) -> (i32, i32, i32) {
    %c0_i32 = arith.constant 0 : i32
    %c0_i32_0 = arith.constant 0 : i32
    %c0_i32_1 = arith.constant 0 : i32
    return %arg1, %c0_i32, %c0_i32_0 : i32, i32, i32
  }
  func.func @transform_7(%arg0: i32, %arg1: i32) -> (i32, i32, i32) {
    %c0_i32 = arith.constant 0 : i32
    %c0_i32_0 = arith.constant 0 : i32
    %c0_i32_1 = arith.constant 0 : i32
    return %arg1, %c0_i32, %c0_i32_0 : i32, i32, i32
  }
  func.func @transform_8(%arg0: i32, %arg1: i32) -> (i32, i32, i32) {
    %c0_i32 = arith.constant 0 : i32
    %c0_i32_0 = arith.constant 0 : i32
    %c0_i32_1 = arith.constant 0 : i32
    return %arg1, %c0_i32, %c0_i32_0 : i32, i32, i32
  }
  func.func @transform_9(%arg0: i32, %arg1: i32) -> (i32, i32, i32) {
    %c0_i32 = arith.constant 0 : i32
    %c0_i32_0 = arith.constant 0 : i32
    %c0_i32_1 = arith.constant 0 : i32
    return %arg1, %c0_i32, %c0_i32_0 : i32, i32, i32
  }
  func.func @transform_10(%arg0: i32, %arg1: i32) -> (i32, i32, i32) {
    %c0_i32 = arith.constant 0 : i32
    %c0_i32_0 = arith.constant 0 : i32
    %c0_i32_1 = arith.constant 0 : i32
    return %arg1, %c0_i32, %c0_i32_0 : i32, i32, i32
  }
  func.func @transform_11(%arg0: i32, %arg1: i32) -> (i32, i32, i32) {
    %c0_i32 = arith.constant 0 : i32
    %c0_i32_0 = arith.constant 0 : i32
    %c0_i32_1 = arith.constant 0 : i32
    return %arg1, %c0_i32, %c0_i32_0 : i32, i32, i32
  }
  func.func @transform_12(%arg0: i32, %arg1: i32) -> (i32, i32, i32) {
    %c0_i32 = arith.constant 0 : i32
    %c0_i32_0 = arith.constant 0 : i32
    %c0_i32_1 = arith.constant 0 : i32
    return %arg1, %c0_i32, %c0_i32_0 : i32, i32, i32
  }
  func.func @transform_13(%arg0: i32, %arg1: i32) -> (i32, i32, i32) {
    %c0_i32 = arith.constant 0 : i32
    %c0_i32_0 = arith.constant 0 : i32
    %c0_i32_1 = arith.constant 0 : i32
    return %arg1, %c0_i32, %c0_i32_0 : i32, i32, i32
  }
  func.func @transform_14(%arg0: i32, %arg1: i32) -> (i32, i32, i32) {
    %c0_i32 = arith.constant 0 : i32
    %c0_i32_0 = arith.constant 0 : i32
    %c0_i32_1 = arith.constant 0 : i32
    return %arg1, %c0_i32, %c0_i32_0 : i32, i32, i32
  }
  func.func @transform_15(%arg0: i32, %arg1: i32) -> (i32, i32, i32) {
    %c0_i32 = arith.constant 0 : i32
    %c0_i32_0 = arith.constant 0 : i32
    %c0_i32_1 = arith.constant 0 : i32
    return %arg1, %c0_i32, %c0_i32_0 : i32, i32, i32
  }
  func.func @transform_16(%arg0: i32, %arg1: i32) -> (i32, i32, i32) {
    %c0_i32 = arith.constant 0 : i32
    %c0_i32_0 = arith.constant 0 : i32
    %c0_i32_1 = arith.constant 0 : i32
    return %arg1, %c0_i32, %c0_i32_0 : i32, i32, i32
  }
  func.func @transform_17(%arg0: i32, %arg1: i32) -> (i32, i32, i32) {
    %c0_i32 = arith.constant 0 : i32
    %c0_i32_0 = arith.constant 0 : i32
    %c0_i32_1 = arith.constant 0 : i32
    return %arg1, %c0_i32, %c0_i32_0 : i32, i32, i32
  }
  func.func @transform_18(%arg0: i32, %arg1: i32) -> (i32, i32) {
    %c0_i32 = arith.constant 0 : i32
    %c0_i32_0 = arith.constant 0 : i32
    %c0_i32_1 = arith.constant 0 : i32
    return %c0_i32, %c0_i32_0 : i32, i32
  }
  func.func @transform_19(%arg0: i32, %arg1: i32) -> (i32, i32) {
    %c0_i32 = arith.constant 0 : i32
    %c0_i32_0 = arith.constant 0 : i32
    %c0_i32_1 = arith.constant 0 : i32
    return %c0_i32, %c0_i32_0 : i32, i32
  }
  func.func @transform_20(%arg0: i32, %arg1: i32) -> (i32, i32) {
    %c0_i32 = arith.constant 0 : i32
    %c0_i32_0 = arith.constant 0 : i32
    return %arg0, %c0_i32 : i32, i32
  }
  func.func @transform_21(%arg0: i32, %arg1: i32) -> (i32, i32) {
    %c0_i32 = arith.constant 0 : i32
    %c0_i32_0 = arith.constant 0 : i32
    return %arg0, %c0_i32 : i32, i32
  }
}

</mosaic_0001>

<llo_original>
// kernel: tpu_custom_call.1
$region0: #{tpu_custom_call.1}
  #allocation0 [shape = 'u32[]', space=smem, size = 0x4, offset = 0x4, fixed_abs, tag = 'smem constant byte address 0x4 - core index']
  #allocation1 [shape = 'u32[72,128]{1,0:T(1,128)}', space=vmem, size = 0x9000, scoped, tag = 'internal scratch']
  #allocation2 [shape = 'f32[16,32]{1,0:T(8,128)}', space=vmem, size = 0x2000, scoped, tag = 'scratch operand']
  %s0 = inlined_call_operand.hbm [shape: f32[2,8,32], index: 0, kind: input, shape index: {}]
  %s1 = inlined_call_operand.hbm [shape: f32[2,8,32], index: 1, kind: input, shape index: {}]
  %s2 = inlined_call_operand.hbm [shape: f32[2,8,32], index: 2, kind: input, shape index: {}]
  %s3 = inlined_call_operand.hbm [shape: f32[2,8,32], index: 3, kind: input, shape index: {}]
  %s4 = inlined_call_operand.vmem [shape: f32[2,1,32], index: 4, kind: input, shape index: {}]
  %s5 = inlined_call_operand.vmem [shape: f32[2,1,32], index: 5, kind: input, shape index: {}]
  %s6 = inlined_call_operand.hbm [shape: bf16[2,32,32], index: 6, kind: input, shape index: {}]
  %s7 = inlined_call_operand.vmem [shape: f32[2,1,32], index: 7, kind: input, shape index: {}]
  %s8 = inlined_call_operand.hbm [shape: bf16[2,32,64], index: 8, kind: input, shape index: {}]
  %s9 = inlined_call_operand.vmem [shape: f32[2,1,64], index: 9, kind: input, shape index: {}]
  %s10 = inlined_call_operand.hbm [shape: bf16[2,32,32], index: 10, kind: input, shape index: {}]
  %s11 = inlined_call_operand.vmem [shape: f32[2,1,32], index: 11, kind: input, shape index: {}]
  %s12 = inlined_call_operand.hbm [shape: f32[2,1,32], index: 12, kind: input, shape index: {}]
  %s13 = inlined_call_operand.vmem [shape: f32[2,1,32], index: 13, kind: input, shape index: {}]
  %s14 = inlined_call_operand.hbm [shape: bf16[2,32,32], index: 14, kind: input, shape index: {}]
  %s15 = inlined_call_operand.vmem [shape: f32[2,1,32], index: 15, kind: input, shape index: {}]
  %s16 = inlined_call_operand.hbm [shape: bf16[2,32,32], index: 16, kind: input, shape index: {}]
  %s17 = inlined_call_operand.vmem [shape: f32[2,1,32], index: 17, kind: input, shape index: {}]
  %s18 = inlined_call_operand.vmem [shape: f32[1,32], index: 18, kind: input, shape index: {}]
  %s19 = inlined_call_operand.vmem [shape: f32[1,32], index: 19, kind: input, shape index: {}]
  %s20 = inlined_call_operand.hbm [shape: f32[2,8], index: 20, kind: output, shape index: {0}]
  %s21 = inlined_call_operand.hbm [shape: f32[2,8], index: 21, kind: output, shape index: {1}]
  %22 = xla_tuple %s20, %s21
  %s23 = sld [smem:[#allocation0]]
  $region169: #{tpu_custom_call.1} parent=0
    _
  %s25 = ssub.s32 1, %s23
  %s26 = scalar_select 0, %s25, %s23
  $region1: #{tpu_custom_call.1} parent=0
    #allocation3 [shape = 'u8[8192]{0}', space=vmem, size = 0x2000, scoped, tag = 'input window, operand 0, single buffered']
    #allocation4 [shape = 's32[2]{0}', space=sflag, size = 0x8, scoped, tag = 'scoped memory for tpu_custom_call.1']
    #allocation5 [shape = 's32[2]{0}', space=sflag, size = 0x8, scoped, tag = 'scoped memory for tpu_custom_call.1']
    #allocation6 [shape = 'u8[8192]{0}', space=vmem, size = 0x2000, scoped, tag = 'input window, operand 1, single buffered']
    #allocation7 [shape = 's32[1]{0}', space=sflag, size = 0x4, scoped, tag = 'scoped memory for tpu_custom_call.1']
    #allocation8 [shape = 'u8[8192]{0}', space=vmem, size = 0x2000, scoped, tag = 'input window, operand 2, single buffered']
    #allocation9 [shape = 'u8[8192]{0}', space=vmem, size = 0x2000, scoped, tag = 'input window, operand 3, single buffered']
    #allocation10 [shape = 's32[1]{0}', space=sflag, size = 0x4, scoped, tag = 'scoped memory for tpu_custom_call.1']
    #allocation11 [shape = 'u8[16384]{0}', space=vmem, size = 0x4000, scoped, tag = 'input window, operand 6']
    #allocation12 [shape = 'u8[16384]{0}', space=vmem, size = 0x4000, scoped, tag = 'input window, operand 8']
    #allocation13 [shape = 'u8[16384]{0}', space=vmem, size = 0x4000, scoped, tag = 'input window, operand 10']
    #allocation14 [shape = 'u8[1024]{0}', space=vmem, size = 0x400, scoped, tag = 'input window, operand 12']
    #allocation15 [shape = 'u8[16384]{0}', space=vmem, size = 0x4000, scoped, tag = 'input window, operand 14']
    #allocation16 [shape = 'u8[16384]{0}', space=vmem, size = 0x4000, scoped, tag = 'input window, operand 16']
    #allocation17 [shape = 'u8[1024]{0}', space=vmem, size = 0x400, scoped, tag = 'output window, operand 0, single buffered']
    #allocation18 [shape = 'u8[1024]{0}', space=vmem, size = 0x400, scoped, tag = 'output window, operand 1, single buffered']
    #allocation19 [shape = 's32[1]{0}', space=sflag, size = 0x4, scoped, tag = 'scoped memory for tpu_custom_call.1']
    %27 = vsyncpa [#allocation4], 0
    %28 = vsyncpa [#allocation7], 0
    %29 = vsyncpa [#allocation10], 0
    %30 = vsyncpa [#allocation5], 0
    %31 = vsyncpa [#allocation19], 0
    loop: start=0, step=1, limit=4
    $region2: #{tpu_custom_call.1} parent=1 // loop_pre_header
      _
    $region3: #{tpu_custom_call.1} parent=1 // loop_header
      %s33 = sphi 0, %s37
      %p34 = scmp.ge.s32.totalorder %s33, 4
      %s40 = sphi 0, %s52
      %s41 = sphi 0, %s48
      %s42 = sphi 0, %s40
      %s43 = sphi 0, %s41
      %s44 = sphi 0, %s42
      %s45 = sphi 0, %s43
      %s55 = sphi 0, %s57
      %s58 = sphi 0, %s55
      %s59 = sphi 0, %s58
      %s75 = sphi 0, %s59
      %s81 = sphi 0, %s83
      %s84 = sphi 0, %s81
      %s85 = sphi 0, %s84
      %s101 = sphi 0, %s85
      %s107 = sphi 0, %s109
      %s110 = sphi 0, %s107
      %s111 = sphi 0, %s110
      %s127 = sphi 0, %s111
      %s133 = sphi 0, %s135
      %s136 = sphi 0, %s133
      %s137 = sphi 0, %s136
      %s153 = sphi 0, %s137
      %s159 = sphi 0, %s161
      %s162 = sphi 0, %s159
      %s163 = sphi 0, %s162
      %s179 = sphi 0, %s163
      %s185 = sphi 0, %s187
      %s188 = sphi 0, %s185
      %s189 = sphi 0, %s188
      %s205 = sphi 0, %s189
      %s211 = sphi 0, %s213
      %s214 = sphi 0, %s211
      %s215 = sphi 0, %s214
      %s231 = sphi 0, %s215
      %s237 = sphi 0, %s239
      %s240 = sphi 0, %s237
      %s241 = sphi 0, %s240
      %s257 = sphi 0, %s241
      %s263 = sphi 0, %s265
      %s266 = sphi 0, %s263
      %s267 = sphi 0, %s266
      %s283 = sphi 0, %s267
      %s289 = sphi 0, %s291
      %s292 = sphi 0, %s289
      %s293 = sphi 0, %s292
      %s309 = sphi 0, %s293
      %s315 = sphi 0, %s317
      %s318 = sphi 0, %s315
      %s319 = sphi 0, %s318
      %s335 = sphi 0, %s319
      %s341 = sphi 0, %s343
      %s344 = sphi 0, %s341
      %s345 = sphi 0, %s344
      %s361 = sphi 0, %s345
      %s367 = sphi 0, %s369
      %s370 = sphi 0, %s367
      %s371 = sphi 0, %s370
      %s387 = sphi 0, %s371
      %s393 = sphi 0, %s395
      %s396 = sphi 0, %s393
      %s397 = sphi 0, %s396
      %s413 = sphi 0, %s397
      %s419 = sphi 0, %s421
      %s422 = sphi 0, %s419
      %s423 = sphi 0, %s422
      %s439 = sphi 0, %s423
      %s445 = sphi 0, %s447
      %s448 = sphi 0, %s445
      %s449 = sphi 0, %s448
      %s465 = sphi 0, %s449
      %s471 = sphi 0, %s473
      %s474 = sphi 0, %s471
      %s475 = sphi 0, %s474
      %s491 = sphi 0, %s475
      %s497 = sphi 0, %s499
      %s500 = sphi 0, %s497
      %s501 = sphi 0, %s500
      %s517 = sphi 0, %s501
      %s521 = sphi 0, %s521
      %s523 = sphi 0, %s521
      %s524 = sphi 0, %s523
      %s538 = sphi 0, %s524
      %s542 = sphi 0, %s542
      %s544 = sphi 0, %s542
      %s545 = sphi 0, %s544
      %s559 = sphi 0, %s545
      %s565 = sphi 0, %s567
      %s568 = sphi 0, %s565
      %s569 = sphi 0, %s568
      %s585 = sphi 0, %s569
      %s591 = sphi 0, %s593
      %s594 = sphi 0, %s591
      %s595 = sphi 0, %s594
      %s611 = sphi 0, %s595
    $region4: #{tpu_custom_call.1} parent=1 // loop_header_branch
      %36 = sbr.rel (%p34) target = $region8
    $region5: #{tpu_custom_call.1} parent=1 // loop_body
      %s38 = ssub.s32 %s33, 1
      %s39 = ssub.s32 %s33, 2
      %s46 = sadd.s32 1, %s41
      %p47 = scmp.ge.s32.totalorder %s46, 2
      %s48 = scalar_select %p47, 0, %s46
      %s49 = sadd.s32 1, %s40
      %s50 = scalar_select %p47, %s49, %s40
      %p51 = scmp.ge.s32.totalorder %s50, 1
      %s52 = scalar_select %p51, 0, %s50
      %s53 = ssub.s32 %s40, %s52
      %p54 = scmp.eq.s32.totalorder %s53, 0
      %s56 = sadd.s32 %s55, 1
      %s57 = scalar_select %p54, %s55, %s56
      %p60 = pneg %p54
      %p61 = scmp.eq.s32.totalorder %s33, 1
      %p62 = por %p60, %p61
      %p63 = scmp.ne.s32.totalorder %s55, %s58
      %p64 = scmp.eq.s32.totalorder %s33, 0
      %p65 = por %p63, %p64
      %p66 = scmp.ne.s32.totalorder %s55, %s58
      %p67 = scmp.eq.s32.totalorder %s38, 1
      %p68 = por %p66, %p67
      %p69 = scmp.ne.s32.totalorder %s58, %s59
      %p70 = scmp.eq.s32.totalorder %s38, 0
      %p71 = por %p69, %p70
      %p72 = scmp.ne.s32.totalorder %s58, %s59
      %p73 = scmp.eq.s32.totalorder %s39, 1
      %p74 = por %p72, %p73
      %p76 = scmp.ne.s32.totalorder %s59, %s75
      %p77 = scmp.eq.s32.totalorder %s39, 0
      %p78 = por %p76, %p77
      %s79 = ssub.s32 %s40, %s52
      %p80 = scmp.eq.s32.totalorder %s79, 0
      %s82 = sadd.s32 %s81, 1
      %s83 = scalar_select %p80, %s81, %s82
      %p86 = pneg %p80
      %p87 = scmp.eq.s32.totalorder %s33, 1
      %p88 = por %p86, %p87
      %p89 = scmp.ne.s32.totalorder %s81, %s84
      %p90 = scmp.eq.s32.totalorder %s33, 0
      %p91 = por %p89, %p90
      %p92 = scmp.ne.s32.totalorder %s81, %s84
      %p93 = scmp.eq.s32.totalorder %s38, 1
      %p94 = por %p92, %p93
      %p95 = scmp.ne.s32.totalorder %s84, %s85
      %p96 = scmp.eq.s32.totalorder %s38, 0
      %p97 = por %p95, %p96
      %p98 = scmp.ne.s32.totalorder %s84, %s85
      %p99 = scmp.eq.s32.totalorder %s39, 1
      %p100 = por %p98, %p99
      %p102 = scmp.ne.s32.totalorder %s85, %s101
      %p103 = scmp.eq.s32.totalorder %s39, 0
      %p104 = por %p102, %p103
      %s105 = ssub.s32 %s40, %s52
      %p106 = scmp.eq.s32.totalorder %s105, 0
      %s108 = sadd.s32 %s107, 1
      %s109 = scalar_select %p106, %s107, %s108
      %p112 = pneg %p106
      %p113 = scmp.eq.s32.totalorder %s33, 1
      %p114 = por %p112, %p113
      %p115 = scmp.ne.s32.totalorder %s107, %s110
      %p116 = scmp.eq.s32.totalorder %s33, 0
      %p117 = por %p115, %p116
      %p118 = scmp.ne.s32.totalorder %s107, %s110
      %p119 = scmp.eq.s32.totalorder %s38, 1
      %p120 = por %p118, %p119
      %p121 = scmp.ne.s32.totalorder %s110, %s111
      %p122 = scmp.eq.s32.totalorder %s38, 0
      %p123 = por %p121, %p122
      %p124 = scmp.ne.s32.totalorder %s110, %s111
      %p125 = scmp.eq.s32.totalorder %s39, 1
      %p126 = por %p124, %p125
      %p128 = scmp.ne.s32.totalorder %s111, %s127
      %p129 = scmp.eq.s32.totalorder %s39, 0
      %p130 = por %p128, %p129
      %s131 = ssub.s32 %s40, %s52
      %p132 = scmp.eq.s32.totalorder %s131, 0
      %s134 = sadd.s32 %s133, 1
      %s135 = scalar_select %p132, %s133, %s134
      %p138 = pneg %p132
      %p139 = scmp.eq.s32.totalorder %s33, 1
      %p140 = por %p138, %p139
      %p141 = scmp.ne.s32.totalorder %s133, %s136
      %p142 = scmp.eq.s32.totalorder %s33, 0
      %p143 = por %p141, %p142
      %p144 = scmp.ne.s32.totalorder %s133, %s136
      %p145 = scmp.eq.s32.totalorder %s38, 1
      %p146 = por %p144, %p145
      %p147 = scmp.ne.s32.totalorder %s136, %s137
      %p148 = scmp.eq.s32.totalorder %s38, 0
      %p149 = por %p147, %p148
      %p150 = scmp.ne.s32.totalorder %s136, %s137
      %p151 = scmp.eq.s32.totalorder %s39, 1
      %p152 = por %p150, %p151
      %p154 = scmp.ne.s32.totalorder %s137, %s153
      %p155 = scmp.eq.s32.totalorder %s39, 0
      %p156 = por %p154, %p155
      %s157 = ssub.s32 %s41, %s48
      %p158 = scmp.eq.s32.totalorder %s157, 0
      %s160 = sadd.s32 %s159, 1
      %s161 = scalar_select %p158, %s159, %s160
      %p164 = pneg %p158
      %p165 = scmp.eq.s32.totalorder %s33, 1
      %p166 = por %p164, %p165
      %p167 = scmp.ne.s32.totalorder %s159, %s162
      %p168 = scmp.eq.s32.totalorder %s33, 0
      %p169 = por %p167, %p168
      %p170 = scmp.ne.s32.totalorder %s159, %s162
      %p171 = scmp.eq.s32.totalorder %s38, 1
      %p172 = por %p170, %p171
      %p173 = scmp.ne.s32.totalorder %s162, %s163
      %p174 = scmp.eq.s32.totalorder %s38, 0
      %p175 = por %p173, %p174
      %p176 = scmp.ne.s32.totalorder %s162, %s163
      %p177 = scmp.eq.s32.totalorder %s39, 1
      %p178 = por %p176, %p177
      %p180 = scmp.ne.s32.totalorder %s163, %s179
      %p181 = scmp.eq.s32.totalorder %s39, 0
      %p182 = por %p180, %p181
      %s183 = ssub.s32 %s41, %s48
      %p184 = scmp.eq.s32.totalorder %s183, 0
      %s186 = sadd.s32 %s185, 1
      %s187 = scalar_select %p184, %s185, %s186
      %p190 = pneg %p184
      %p191 = scmp.eq.s32.totalorder %s33, 1
      %p192 = por %p190, %p191
      %p193 = scmp.ne.s32.totalorder %s185, %s188
      %p194 = scmp.eq.s32.totalorder %s33, 0
      %p195 = por %p193, %p194
      %p196 = scmp.ne.s32.totalorder %s185, %s188
      %p197 = scmp.eq.s32.totalorder %s38, 1
      %p198 = por %p196, %p197
      %p199 = scmp.ne.s32.totalorder %s188, %s189
      %p200 = scmp.eq.s32.totalorder %s38, 0
      %p201 = por %p199, %p200
      %p202 = scmp.ne.s32.totalorder %s188, %s189
      %p203 = scmp.eq.s32.totalorder %s39, 1
      %p204 = por %p202, %p203
      %p206 = scmp.ne.s32.totalorder %s189, %s205
      %p207 = scmp.eq.s32.totalorder %s39, 0
      %p208 = por %p206, %p207
      %s209 = ssub.s32 %s41, %s48
      %p210 = scmp.eq.s32.totalorder %s209, 0
      %s212 = sadd.s32 %s211, 1
      %s213 = scalar_select %p210, %s211, %s212
      %p216 = pneg %p210
      %p217 = scmp.eq.s32.totalorder %s33, 1
      %p218 = por %p216, %p217
      %p219 = scmp.ne.s32.totalorder %s211, %s214
      %p220 = scmp.eq.s32.totalorder %s33, 0
      %p221 = por %p219, %p220
      %p222 = scmp.ne.s32.totalorder %s211, %s214
      %p223 = scmp.eq.s32.totalorder %s38, 1
      %p224 = por %p222, %p223
      %p225 = scmp.ne.s32.totalorder %s214, %s215
      %p226 = scmp.eq.s32.totalorder %s38, 0
      %p227 = por %p225, %p226
      %p228 = scmp.ne.s32.totalorder %s214, %s215
      %p229 = scmp.eq.s32.totalorder %s39, 1
      %p230 = por %p228, %p229
      %p232 = scmp.ne.s32.totalorder %s215, %s231
      %p233 = scmp.eq.s32.totalorder %s39, 0
      %p234 = por %p232, %p233
      %s235 = ssub.s32 %s41, %s48
      %p236 = scmp.eq.s32.totalorder %s235, 0
      %s238 = sadd.s32 %s237, 1
      %s239 = scalar_select %p236, %s237, %s238
      %p242 = pneg %p236
      %p243 = scmp.eq.s32.totalorder %s33, 1
      %p244 = por %p242, %p243
      %p245 = scmp.ne.s32.totalorder %s237, %s240
      %p246 = scmp.eq.s32.totalorder %s33, 0
      %p247 = por %p245, %p246
      %p248 = scmp.ne.s32.totalorder %s237, %s240
      %p249 = scmp.eq.s32.totalorder %s38, 1
      %p250 = por %p248, %p249
      %p251 = scmp.ne.s32.totalorder %s240, %s241
      %p252 = scmp.eq.s32.totalorder %s38, 0
      %p253 = por %p251, %p252
      %p254 = scmp.ne.s32.totalorder %s240, %s241
      %p255 = scmp.eq.s32.totalorder %s39, 1
      %p256 = por %p254, %p255
      %p258 = scmp.ne.s32.totalorder %s241, %s257
      %p259 = scmp.eq.s32.totalorder %s39, 0
      %p260 = por %p258, %p259
      %s261 = ssub.s32 %s41, %s48
      %p262 = scmp.eq.s32.totalorder %s261, 0
      %s264 = sadd.s32 %s263, 1
      %s265 = scalar_select %p262, %s263, %s264
      %p268 = pneg %p262
      %p269 = scmp.eq.s32.totalorder %s33, 1
      %p270 = por %p268, %p269
      %p271 = scmp.ne.s32.totalorder %s263, %s266
      %p272 = scmp.eq.s32.totalorder %s33, 0
      %p273 = por %p271, %p272
      %p274 = scmp.ne.s32.totalorder %s263, %s266
      %p275 = scmp.eq.s32.totalorder %s38, 1
      %p276 = por %p274, %p275
      %p277 = scmp.ne.s32.totalorder %s266, %s267
      %p278 = scmp.eq.s32.totalorder %s38, 0
      %p279 = por %p277, %p278
      %p280 = scmp.ne.s32.totalorder %s266, %s267
      %p281 = scmp.eq.s32.totalorder %s39, 1
      %p282 = por %p280, %p281
      %p284 = scmp.ne.s32.totalorder %s267, %s283
      %p285 = scmp.eq.s32.totalorder %s39, 0
      %p286 = por %p284, %p285
      %s287 = ssub.s32 %s41, %s48
      %p288 = scmp.eq.s32.totalorder %s287, 0
      %s290 = sadd.s32 %s289, 1
      %s291 = scalar_select %p288, %s289, %s290
      %p294 = pneg %p288
      %p295 = scmp.eq.s32.totalorder %s33, 1
      %p296 = por %p294, %p295
      %p297 = scmp.ne.s32.totalorder %s289, %s292
      %p298 = scmp.eq.s32.totalorder %s33, 0
      %p299 = por %p297, %p298
      %p300 = scmp.ne.s32.totalorder %s289, %s292
      %p301 = scmp.eq.s32.totalorder %s38, 1
      %p302 = por %p300, %p301
      %p303 = scmp.ne.s32.totalorder %s292, %s293
      %p304 = scmp.eq.s32.totalorder %s38, 0
      %p305 = por %p303, %p304
      %p306 = scmp.ne.s32.totalorder %s292, %s293
      %p307 = scmp.eq.s32.totalorder %s39, 1
      %p308 = por %p306, %p307
      %p310 = scmp.ne.s32.totalorder %s293, %s309
      %p311 = scmp.eq.s32.totalorder %s39, 0
      %p312 = por %p310, %p311
      %s313 = ssub.s32 %s41, %s48
      %p314 = scmp.eq.s32.totalorder %s313, 0
      %s316 = sadd.s32 %s315, 1
      %s317 = scalar_select %p314, %s315, %s316
      %p320 = pneg %p314
      %p321 = scmp.eq.s32.totalorder %s33, 1
      %p322 = por %p320, %p321
      %p323 = scmp.ne.s32.totalorder %s315, %s318
      %p324 = scmp.eq.s32.totalorder %s33, 0
      %p325 = por %p323, %p324
      %p326 = scmp.ne.s32.totalorder %s315, %s318
      %p327 = scmp.eq.s32.totalorder %s38, 1
      %p328 = por %p326, %p327
      %p329 = scmp.ne.s32.totalorder %s318, %s319
      %p330 = scmp.eq.s32.totalorder %s38, 0
      %p331 = por %p329, %p330
      %p332 = scmp.ne.s32.totalorder %s318, %s319
      %p333 = scmp.eq.s32.totalorder %s39, 1
      %p334 = por %p332, %p333
      %p336 = scmp.ne.s32.totalorder %s319, %s335
      %p337 = scmp.eq.s32.totalorder %s39, 0
      %p338 = por %p336, %p337
      %s339 = ssub.s32 %s41, %s48
      %p340 = scmp.eq.s32.totalorder %s339, 0
      %s342 = sadd.s32 %s341, 1
      %s343 = scalar_select %p340, %s341, %s342
      %p346 = pneg %p340
      %p347 = scmp.eq.s32.totalorder %s33, 1
      %p348 = por %p346, %p347
      %p349 = scmp.ne.s32.totalorder %s341, %s344
      %p350 = scmp.eq.s32.totalorder %s33, 0
      %p351 = por %p349, %p350
      %p352 = scmp.ne.s32.totalorder %s341, %s344
      %p353 = scmp.eq.s32.totalorder %s38, 1
      %p354 = por %p352, %p353
      %p355 = scmp.ne.s32.totalorder %s344, %s345
      %p356 = scmp.eq.s32.totalorder %s38, 0
      %p357 = por %p355, %p356
      %p358 = scmp.ne.s32.totalorder %s344, %s345
      %p359 = scmp.eq.s32.totalorder %s39, 1
      %p360 = por %p358, %p359
      %p362 = scmp.ne.s32.totalorder %s345, %s361
      %p363 = scmp.eq.s32.totalorder %s39, 0
      %p364 = por %p362, %p363
      %s365 = ssub.s32 %s41, %s48
      %p366 = scmp.eq.s32.totalorder %s365, 0
      %s368 = sadd.s32 %s367, 1
      %s369 = scalar_select %p366, %s367, %s368
      %p372 = pneg %p366
      %p373 = scmp.eq.s32.totalorder %s33, 1
      %p374 = por %p372, %p373
      %p375 = scmp.ne.s32.totalorder %s367, %s370
      %p376 = scmp.eq.s32.totalorder %s33, 0
      %p377 = por %p375, %p376
      %p378 = scmp.ne.s32.totalorder %s367, %s370
      %p379 = scmp.eq.s32.totalorder %s38, 1
      %p380 = por %p378, %p379
      %p381 = scmp.ne.s32.totalorder %s370, %s371
      %p382 = scmp.eq.s32.totalorder %s38, 0
      %p383 = por %p381, %p382
      %p384 = scmp.ne.s32.totalorder %s370, %s371
      %p385 = scmp.eq.s32.totalorder %s39, 1
      %p386 = por %p384, %p385
      %p388 = scmp.ne.s32.totalorder %s371, %s387
      %p389 = scmp.eq.s32.totalorder %s39, 0
      %p390 = por %p388, %p389
      %s391 = ssub.s32 %s41, %s48
      %p392 = scmp.eq.s32.totalorder %s391, 0
      %s394 = sadd.s32 %s393, 1
      %s395 = scalar_select %p392, %s393, %s394
      %p398 = pneg %p392
      %p399 = scmp.eq.s32.totalorder %s33, 1
      %p400 = por %p398, %p399
      %p401 = scmp.ne.s32.totalorder %s393, %s396
      %p402 = scmp.eq.s32.totalorder %s33, 0
      %p403 = por %p401, %p402
      %p404 = scmp.ne.s32.totalorder %s393, %s396
      %p405 = scmp.eq.s32.totalorder %s38, 1
      %p406 = por %p404, %p405
      %p407 = scmp.ne.s32.totalorder %s396, %s397
      %p408 = scmp.eq.s32.totalorder %s38, 0
      %p409 = por %p407, %p408
      %p410 = scmp.ne.s32.totalorder %s396, %s397
      %p411 = scmp.eq.s32.totalorder %s39, 1
      %p412 = por %p410, %p411
      %p414 = scmp.ne.s32.totalorder %s397, %s413
      %p415 = scmp.eq.s32.totalorder %s39, 0
      %p416 = por %p414, %p415
      %s417 = ssub.s32 %s41, %s48
      %p418 = scmp.eq.s32.totalorder %s417, 0
      %s420 = sadd.s32 %s419, 1
      %s421 = scalar_select %p418, %s419, %s420
      %p424 = pneg %p418
      %p425 = scmp.eq.s32.totalorder %s33, 1
      %p426 = por %p424, %p425
      %p427 = scmp.ne.s32.totalorder %s419, %s422
      %p428 = scmp.eq.s32.totalorder %s33, 0
      %p429 = por %p427, %p428
      %p430 = scmp.ne.s32.totalorder %s419, %s422
      %p431 = scmp.eq.s32.totalorder %s38, 1
      %p432 = por %p430, %p431
      %p433 = scmp.ne.s32.totalorder %s422, %s423
      %p434 = scmp.eq.s32.totalorder %s38, 0
      %p435 = por %p433, %p434
      %p436 = scmp.ne.s32.totalorder %s422, %s423
      %p437 = scmp.eq.s32.totalorder %s39, 1
      %p438 = por %p436, %p437
      %p440 = scmp.ne.s32.totalorder %s423, %s439
      %p441 = scmp.eq.s32.totalorder %s39, 0
      %p442 = por %p440, %p441
      %s443 = ssub.s32 %s41, %s48
      %p444 = scmp.eq.s32.totalorder %s443, 0
      %s446 = sadd.s32 %s445, 1
      %s447 = scalar_select %p444, %s445, %s446
      %p450 = pneg %p444
      %p451 = scmp.eq.s32.totalorder %s33, 1
      %p452 = por %p450, %p451
      %p453 = scmp.ne.s32.totalorder %s445, %s448
      %p454 = scmp.eq.s32.totalorder %s33, 0
      %p455 = por %p453, %p454
      %p456 = scmp.ne.s32.totalorder %s445, %s448
      %p457 = scmp.eq.s32.totalorder %s38, 1
      %p458 = por %p456, %p457
      %p459 = scmp.ne.s32.totalorder %s448, %s449
      %p460 = scmp.eq.s32.totalorder %s38, 0
      %p461 = por %p459, %p460
      %p462 = scmp.ne.s32.totalorder %s448, %s449
      %p463 = scmp.eq.s32.totalorder %s39, 1
      %p464 = por %p462, %p463
      %p466 = scmp.ne.s32.totalorder %s449, %s465
      %p467 = scmp.eq.s32.totalorder %s39, 0
      %p468 = por %p466, %p467
      %s469 = ssub.s32 %s41, %s48
      %p470 = scmp.eq.s32.totalorder %s469, 0
      %s472 = sadd.s32 %s471, 1
      %s473 = scalar_select %p470, %s471, %s472
      %p476 = pneg %p470
      %p477 = scmp.eq.s32.totalorder %s33, 1
      %p478 = por %p476, %p477
      %p479 = scmp.ne.s32.totalorder %s471, %s474
      %p480 = scmp.eq.s32.totalorder %s33, 0
      %p481 = por %p479, %p480
      %p482 = scmp.ne.s32.totalorder %s471, %s474
      %p483 = scmp.eq.s32.totalorder %s38, 1
      %p484 = por %p482, %p483
      %p485 = scmp.ne.s32.totalorder %s474, %s475
      %p486 = scmp.eq.s32.totalorder %s38, 0
      %p487 = por %p485, %p486
      %p488 = scmp.ne.s32.totalorder %s474, %s475
      %p489 = scmp.eq.s32.totalorder %s39, 1
      %p490 = por %p488, %p489
      %p492 = scmp.ne.s32.totalorder %s475, %s491
      %p493 = scmp.eq.s32.totalorder %s39, 0
      %p494 = por %p492, %p493
      %s495 = ssub.s32 %s41, %s48
      %p496 = scmp.eq.s32.totalorder %s495, 0
      %s498 = sadd.s32 %s497, 1
      %s499 = scalar_select %p496, %s497, %s498
      %p502 = pneg %p496
      %p503 = scmp.eq.s32.totalorder %s33, 1
      %p504 = por %p502, %p503
      %p505 = scmp.ne.s32.totalorder %s497, %s500
      %p506 = scmp.eq.s32.totalorder %s33, 0
      %p507 = por %p505, %p506
      %p508 = scmp.ne.s32.totalorder %s497, %s500
      %p509 = scmp.eq.s32.totalorder %s38, 1
      %p510 = por %p508, %p509
      %p511 = scmp.ne.s32.totalorder %s500, %s501
      %p512 = scmp.eq.s32.totalorder %s38, 0
      %p513 = por %p511, %p512
      %p514 = scmp.ne.s32.totalorder %s500, %s501
      %p515 = scmp.eq.s32.totalorder %s39, 1
      %p516 = por %p514, %p515
      %p518 = scmp.ne.s32.totalorder %s501, %s517
      %p519 = scmp.eq.s32.totalorder %s39, 0
      %p520 = por %p518, %p519
      %s522 = sadd.s32 %s521, 1
      %p525 = scmp.eq.s32.totalorder %s33, 1
      %p526 = scmp.ne.s32.totalorder %s521, %s523
      %p527 = scmp.eq.s32.totalorder %s33, 0
      %p528 = por %p526, %p527
      %p529 = scmp.ne.s32.totalorder %s521, %s523
      %p530 = scmp.eq.s32.totalorder %s38, 1
      %p531 = por %p529, %p530
      %p532 = scmp.ne.s32.totalorder %s523, %s524
      %p533 = scmp.eq.s32.totalorder %s38, 0
      %p534 = por %p532, %p533
      %p535 = scmp.ne.s32.totalorder %s523, %s524
      %p536 = scmp.eq.s32.totalorder %s39, 1
      %p537 = por %p535, %p536
      %p539 = scmp.ne.s32.totalorder %s524, %s538
      %p540 = scmp.eq.s32.totalorder %s39, 0
      %p541 = por %p539, %p540
      %s543 = sadd.s32 %s542, 1
      %p546 = scmp.eq.s32.totalorder %s33, 1
      %p547 = scmp.ne.s32.totalorder %s542, %s544
      %p548 = scmp.eq.s32.totalorder %s33, 0
      %p549 = por %p547, %p548
      %p550 = scmp.ne.s32.totalorder %s542, %s544
      %p551 = scmp.eq.s32.totalorder %s38, 1
      %p552 = por %p550, %p551
      %p553 = scmp.ne.s32.totalorder %s544, %s545
      %p554 = scmp.eq.s32.totalorder %s38, 0
      %p555 = por %p553, %p554
      %p556 = scmp.ne.s32.totalorder %s544, %s545
      %p557 = scmp.eq.s32.totalorder %s39, 1
      %p558 = por %p556, %p557
      %p560 = scmp.ne.s32.totalorder %s545, %s559
      %p561 = scmp.eq.s32.totalorder %s39, 0
      %p562 = por %p560, %p561
      %s563 = ssub.s32 %s40, %s52
      %p564 = scmp.eq.s32.totalorder %s563, 0
      %s566 = sadd.s32 %s565, 1
      %s567 = scalar_select %p564, %s565, %s566
      %p570 = pneg %p564
      %p571 = scmp.eq.s32.totalorder %s33, 1
      %p572 = por %p570, %p571
      %p573 = scmp.ne.s32.totalorder %s565, %s568
      %p574 = scmp.eq.s32.totalorder %s33, 0
      %p575 = por %p573, %p574
      %p576 = scmp.ne.s32.totalorder %s565, %s568
      %p577 = scmp.eq.s32.totalorder %s38, 1
      %p578 = por %p576, %p577
      %p579 = scmp.ne.s32.totalorder %s568, %s569
      %p580 = scmp.eq.s32.totalorder %s38, 0
      %p581 = por %p579, %p580
      %p582 = scmp.ne.s32.totalorder %s568, %s569
      %p583 = scmp.eq.s32.totalorder %s39, 1
      %p584 = por %p582, %p583
      %p586 = scmp.ne.s32.totalorder %s569, %s585
      %p587 = scmp.eq.s32.totalorder %s39, 0
      %p588 = por %p586, %p587
      %s589 = ssub.s32 %s40, %s52
      %p590 = scmp.eq.s32.totalorder %s589, 0
      %s592 = sadd.s32 %s591, 1
      %s593 = scalar_select %p590, %s591, %s592
      %p596 = pneg %p590
      %p597 = scmp.eq.s32.totalorder %s33, 1
      %p598 = por %p596, %p597
      %p599 = scmp.ne.s32.totalorder %s591, %s594
      %p600 = scmp.eq.s32.totalorder %s33, 0
      %p601 = por %p599, %p600
      %p602 = scmp.ne.s32.totalorder %s591, %s594
      %p603 = scmp.eq.s32.totalorder %s38, 1
      %p604 = por %p602, %p603
      %p605 = scmp.ne.s32.totalorder %s594, %s595
      %p606 = scmp.eq.s32.totalorder %s38, 0
      %p607 = por %p605, %p606
      %p608 = scmp.ne.s32.totalorder %s594, %s595
      %p609 = scmp.eq.s32.totalorder %s39, 1
      %p610 = por %p608, %p609
      %p612 = scmp.ne.s32.totalorder %s595, %s611
      %p613 = scmp.eq.s32.totalorder %s39, 0
      %p614 = por %p612, %p613
      %p615 = scmp.le.s32.totalorder 1, %s33
      %p616 = scmp.lt.s32.totalorder %s33, 3
      %p617 = pnand %p615, %p616
      %p618 = pneg %p617
      // Predicated region
      $region9: #{tpu_custom_call.1} parent=5 // pred_check
        _
      $region10: #{tpu_custom_call.1} parent=5 // pred_check_branch
        %620 = sbr.rel (%p617) target = $region12
      $region11: #{tpu_custom_call.1} parent=5 // pred_region
        %s621 = ssub.s32 %s33, 1
        // Predicated region
        $region13: #{tpu_custom_call.1} parent=11 // pred_check
          %p622 = pneg %p71
        $region14: #{tpu_custom_call.1} parent=11 // pred_check_branch
          %624 = sbr.rel (%p622) target = $region16
        $region15: #{tpu_custom_call.1} parent=11 // pred_region
          %s625 = smul.u32 2, %s42
          %627 = vsyncadd [#allocation4], 0
          %s628 = smul.addr %s625, 8
          %s629 = scalar_lea.hbm %s0, %s628
          %s630 = sshll.u32 %s629, 4
          %s631 = int_to_ptr.hbm [resolvable:$true] %s630
          %s632 = sshll.u32 [#allocation3], 4
          %s633 = int_to_ptr.vmem [resolvable:$true] %s632
          %638 = dma.hbm_to_vmem [thread:$0]  %s631, 256, %s633, [#allocation4], 128, 128, 8
        $region16: #{tpu_custom_call.1} parent=11 // pred_fallthru
          _
        // Predicated region
        $region17: #{tpu_custom_call.1} parent=11 // pred_check
          %p639 = pneg %p97
        $region18: #{tpu_custom_call.1} parent=11 // pred_check_branch
          %641 = sbr.rel (%p639) target = $region20
        $region19: #{tpu_custom_call.1} parent=11 // pred_region
          %s642 = smul.u32 2, %s42
          %644 = vsyncadd [#allocation7], 0
          %s645 = smul.addr %s642, 8
          %s646 = scalar_lea.hbm %s1, %s645
          %s647 = sshll.u32 %s646, 4
          %s648 = int_to_ptr.hbm [resolvable:$true] %s647
          %s649 = sshll.u32 [#allocation6], 4
          %s650 = int_to_ptr.vmem [resolvable:$true] %s649
          %655 = dma.hbm_to_vmem [thread:$0]  %s648, 256, %s650, [#allocation7], 128, 128, 8
        $region20: #{tpu_custom_call.1} parent=11 // pred_fallthru
          _
        // Predicated region
        $region21: #{tpu_custom_call.1} parent=11 // pred_check
          %p656 = pneg %p123
        $region22: #{tpu_custom_call.1} parent=11 // pred_check_branch
          %658 = sbr.rel (%p656) target = $region24
        $region23: #{tpu_custom_call.1} parent=11 // pred_region
          %s659 = smul.u32 2, %s42
          %661 = vsyncadd [#allocation7], 0
          %s662 = smul.addr %s659, 8
          %s663 = scalar_lea.hbm %s2, %s662
          %s664 = sshll.u32 %s663, 4
          %s665 = int_to_ptr.hbm [resolvable:$true] %s664
          %s666 = sshll.u32 [#allocation8], 4
          %s667 = int_to_ptr.vmem [resolvable:$true] %s666
          %672 = dma.hbm_to_vmem [thread:$0]  %s665, 256, %s667, [#allocation7], 128, 128, 8
        $region24: #{tpu_custom_call.1} parent=11 // pred_fallthru
          _
        // Predicated region
        $region25: #{tpu_custom_call.1} parent=11 // pred_check
          %p673 = pneg %p149
        $region26: #{tpu_custom_call.1} parent=11 // pred_check_branch
          %675 = sbr.rel (%p673) target = $region28
        $region27: #{tpu_custom_call.1} parent=11 // pred_region
          %s676 = smul.u32 2, %s42
          %678 = vsyncadd [#allocation10], 0
          %s679 = smul.addr %s676, 8
          %s680 = scalar_lea.hbm %s3, %s679
          %s681 = sshll.u32 %s680, 4
          %s682 = int_to_ptr.hbm [resolvable:$true] %s681
          %s683 = sshll.u32 [#allocation9], 4
          %s684 = int_to_ptr.vmem [resolvable:$true] %s683
          %689 = dma.hbm_to_vmem [thread:$0]  %s682, 256, %s684, [#allocation10], 128, 128, 8
        $region28: #{tpu_custom_call.1} parent=11 // pred_fallthru
          _
        // Predicated region
        $region29: #{tpu_custom_call.1} parent=11 // pred_check
          %p690 = pneg %p534
        $region30: #{tpu_custom_call.1} parent=11 // pred_check_branch
          %692 = sbr.rel (%p690) target = $region32
        $region31: #{tpu_custom_call.1} parent=11 // pred_region
          _
        $region32: #{tpu_custom_call.1} parent=11 // pred_fallthru
          _
        // Predicated region
        $region33: #{tpu_custom_call.1} parent=11 // pred_check
          %p693 = pneg %p555
        $region34: #{tpu_custom_call.1} parent=11 // pred_check_branch
          %695 = sbr.rel (%p693) target = $region36
        $region35: #{tpu_custom_call.1} parent=11 // pred_region
          _
        $region36: #{tpu_custom_call.1} parent=11 // pred_fallthru
          _
      $region12: #{tpu_custom_call.1} parent=5 // pred_fallthru
        _
      %p696 = scmp.lt.s32.totalorder %s33, 2
      // Predicated region
      $region37: #{tpu_custom_call.1} parent=5 // pred_check
        %p697 = pneg %p696
      $region38: #{tpu_custom_call.1} parent=5 // pred_check_branch
        %699 = sbr.rel (%p697) target = $region40
      $region39: #{tpu_custom_call.1} parent=5 // pred_region
        // Predicated region
        $region41: #{tpu_custom_call.1} parent=39 // pred_check
          %p700 = pneg %p169
        $region42: #{tpu_custom_call.1} parent=39 // pred_check_branch
          %702 = sbr.rel (%p700) target = $region44
        $region43: #{tpu_custom_call.1} parent=39 // pred_region
          %p703 = scmp.lt.s32.totalorder %s41, 1
          %s704 = scalar_select %p703, %s41, 1
          %s705 = scalar_lea.vmem %s4, %s704
        $region44: #{tpu_custom_call.1} parent=39 // pred_fallthru
          _
        // Predicated region
        $region45: #{tpu_custom_call.1} parent=39 // pred_check
          %p706 = pneg %p195
        $region46: #{tpu_custom_call.1} parent=39 // pred_check_branch
          %708 = sbr.rel (%p706) target = $region48
        $region47: #{tpu_custom_call.1} parent=39 // pred_region
          %p709 = scmp.lt.s32.totalorder %s41, 1
          %s710 = scalar_select %p709, %s41, 1
          %s711 = scalar_lea.vmem %s5, %s710
        $region48: #{tpu_custom_call.1} parent=39 // pred_fallthru
          _
        // Predicated region
        $region49: #{tpu_custom_call.1} parent=39 // pred_check
          %p712 = pneg %p221
        $region50: #{tpu_custom_call.1} parent=39 // pred_check_branch
          %714 = sbr.rel (%p712) target = $region52
        $region51: #{tpu_custom_call.1} parent=39 // pred_region
          %s715 = sand.u32 %s33, 1
          %s716 = scalar_lea.sflag [#allocation4], %s715
          %s717 = sand.u32 %s211, 1
          %s718 = smul.addr %s717, 16
          %s719 = scalar_lea.vmem [#allocation11], %s718
          %721 = vsyncadd %s716, 0
          %s722 = smul.addr %s41, 4
          %s723 = smul.addr %s722, 4
          %s724 = scalar_lea.hbm %s6, %s723
          %s725 = sshll.u32 %s724, 4
          %s726 = int_to_ptr.hbm [resolvable:$true] %s725
          %s727 = sshll.u32 %s719, 4
          %s728 = int_to_ptr.vmem [resolvable:$true] %s727
          %733 = dma.hbm_to_vmem [thread:$0]  %s726, 256, %s728, %s716, 64, 64, 4
        $region52: #{tpu_custom_call.1} parent=39 // pred_fallthru
          _
        // Predicated region
        $region53: #{tpu_custom_call.1} parent=39 // pred_check
          %p734 = pneg %p247
        $region54: #{tpu_custom_call.1} parent=39 // pred_check_branch
          %736 = sbr.rel (%p734) target = $region56
        $region55: #{tpu_custom_call.1} parent=39 // pred_region
          %p737 = scmp.lt.s32.totalorder %s41, 1
          %s738 = scalar_select %p737, %s41, 1
          %s739 = scalar_lea.vmem %s7, %s738
        $region56: #{tpu_custom_call.1} parent=39 // pred_fallthru
          _
        // Predicated region
        $region57: #{tpu_custom_call.1} parent=39 // pred_check
          %p740 = pneg %p273
        $region58: #{tpu_custom_call.1} parent=39 // pred_check_branch
          %742 = sbr.rel (%p740) target = $region60
        $region59: #{tpu_custom_call.1} parent=39 // pred_region
          %s743 = sand.u32 %s33, 1
          %s744 = scalar_lea.sflag [#allocation4], %s743
          %s745 = sand.u32 %s263, 1
          %s746 = smul.addr %s745, 16
          %s747 = scalar_lea.vmem [#allocation12], %s746
          %749 = vsyncadd %s744, 0
          %s750 = smul.addr %s41, 4
          %s751 = smul.addr %s750, 4
          %s752 = scalar_lea.hbm %s8, %s751
          %s753 = sshll.u32 %s752, 4
          %s754 = int_to_ptr.hbm [resolvable:$true] %s753
          %s755 = sshll.u32 %s747, 4
          %s756 = int_to_ptr.vmem [resolvable:$true] %s755
          %761 = dma.hbm_to_vmem [thread:$0]  %s754, 256, %s756, %s744, 64, 64, 4
        $region60: #{tpu_custom_call.1} parent=39 // pred_fallthru
          _
        // Predicated region
        $region61: #{tpu_custom_call.1} parent=39 // pred_check
          %p762 = pneg %p299
        $region62: #{tpu_custom_call.1} parent=39 // pred_check_branch
          %764 = sbr.rel (%p762) target = $region64
        $region63: #{tpu_custom_call.1} parent=39 // pred_region
          %p765 = scmp.lt.s32.totalorder %s41, 1
          %s766 = scalar_select %p765, %s41, 1
          %s767 = scalar_lea.vmem %s9, %s766
        $region64: #{tpu_custom_call.1} parent=39 // pred_fallthru
          _
        // Predicated region
        $region65: #{tpu_custom_call.1} parent=39 // pred_check
          %p768 = pneg %p325
        $region66: #{tpu_custom_call.1} parent=39 // pred_check_branch
          %770 = sbr.rel (%p768) target = $region68
        $region67: #{tpu_custom_call.1} parent=39 // pred_region
          %s771 = sand.u32 %s33, 1
          %s772 = scalar_lea.sflag [#allocation4], %s771
          %s773 = sand.u32 %s315, 1
          %s774 = smul.addr %s773, 16
          %s775 = scalar_lea.vmem [#allocation13], %s774
          %777 = vsyncadd %s772, 0
          %s778 = smul.addr %s41, 4
          %s779 = smul.addr %s778, 4
          %s780 = scalar_lea.hbm %s10, %s779
          %s781 = sshll.u32 %s780, 4
          %s782 = int_to_ptr.hbm [resolvable:$true] %s781
          %s783 = sshll.u32 %s775, 4
          %s784 = int_to_ptr.vmem [resolvable:$true] %s783
          %789 = dma.hbm_to_vmem [thread:$0]  %s782, 256, %s784, %s772, 64, 64, 4
        $region68: #{tpu_custom_call.1} parent=39 // pred_fallthru
          _
        // Predicated region
        $region69: #{tpu_custom_call.1} parent=39 // pred_check
          %p790 = pneg %p351
        $region70: #{tpu_custom_call.1} parent=39 // pred_check_branch
          %792 = sbr.rel (%p790) target = $region72
        $region71: #{tpu_custom_call.1} parent=39 // pred_region
          %p793 = scmp.lt.s32.totalorder %s41, 1
          %s794 = scalar_select %p793, %s41, 1
          %s795 = scalar_lea.vmem %s11, %s794
        $region72: #{tpu_custom_call.1} parent=39 // pred_fallthru
          _
        // Predicated region
        $region73: #{tpu_custom_call.1} parent=39 // pred_check
          %p796 = pneg %p377
        $region74: #{tpu_custom_call.1} parent=39 // pred_check_branch
          %798 = sbr.rel (%p796) target = $region76
        $region75: #{tpu_custom_call.1} parent=39 // pred_region
          %s799 = sand.u32 %s33, 1
          %s800 = scalar_lea.sflag [#allocation4], %s799
          %s801 = sand.u32 %s367, 1
          %s802 = scalar_lea.vmem [#allocation14], %s801
          %804 = vsyncadd %s800, 0
          %s805 = scalar_lea.hbm %s12, %s41
          %s807 = sshll.u32 %s805, 4
          %s808 = int_to_ptr.hbm [resolvable:$true] %s807
          %s809 = sshll.u32 %s802, 4
          %s810 = int_to_ptr.vmem [resolvable:$true] %s809
          %812 = dma.hbm_to_vmem [thread:$0]  %s808, 16, %s810, %s800
        $region76: #{tpu_custom_call.1} parent=39 // pred_fallthru
          _
        // Predicated region
        $region77: #{tpu_custom_call.1} parent=39 // pred_check
          %p813 = pneg %p403
        $region78: #{tpu_custom_call.1} parent=39 // pred_check_branch
          %815 = sbr.rel (%p813) target = $region80
        $region79: #{tpu_custom_call.1} parent=39 // pred_region
          %p816 = scmp.lt.s32.totalorder %s41, 1
          %s817 = scalar_select %p816, %s41, 1
          %s818 = scalar_lea.vmem %s13, %s817
        $region80: #{tpu_custom_call.1} parent=39 // pred_fallthru
          _
        // Predicated region
        $region81: #{tpu_custom_call.1} parent=39 // pred_check
          %p819 = pneg %p429
        $region82: #{tpu_custom_call.1} parent=39 // pred_check_branch
          %821 = sbr.rel (%p819) target = $region84
        $region83: #{tpu_custom_call.1} parent=39 // pred_region
          %s822 = sand.u32 %s33, 1
          %s823 = scalar_lea.sflag [#allocation4], %s822
          %s824 = sand.u32 %s419, 1
          %s825 = smul.addr %s824, 16
          %s826 = scalar_lea.vmem [#allocation15], %s825
          %828 = vsyncadd %s823, 0
          %s829 = smul.addr %s41, 4
          %s830 = smul.addr %s829, 4
          %s831 = scalar_lea.hbm %s14, %s830
          %s832 = sshll.u32 %s831, 4
          %s833 = int_to_ptr.hbm [resolvable:$true] %s832
          %s834 = sshll.u32 %s826, 4
          %s835 = int_to_ptr.vmem [resolvable:$true] %s834
          %840 = dma.hbm_to_vmem [thread:$0]  %s833, 256, %s835, %s823, 64, 64, 4
        $region84: #{tpu_custom_call.1} parent=39 // pred_fallthru
          _
        // Predicated region
        $region85: #{tpu_custom_call.1} parent=39 // pred_check
          %p841 = pneg %p455
        $region86: #{tpu_custom_call.1} parent=39 // pred_check_branch
          %843 = sbr.rel (%p841) target = $region88
        $region87: #{tpu_custom_call.1} parent=39 // pred_region
          %p844 = scmp.lt.s32.totalorder %s41, 1
          %s845 = scalar_select %p844, %s41, 1
          %s846 = scalar_lea.vmem %s15, %s845
        $region88: #{tpu_custom_call.1} parent=39 // pred_fallthru
          _
        // Predicated region
        $region89: #{tpu_custom_call.1} parent=39 // pred_check
          %p847 = pneg %p481
        $region90: #{tpu_custom_call.1} parent=39 // pred_check_branch
          %849 = sbr.rel (%p847) target = $region92
        $region91: #{tpu_custom_call.1} parent=39 // pred_region
          %s850 = sand.u32 %s33, 1
          %s851 = scalar_lea.sflag [#allocation4], %s850
          %s852 = sand.u32 %s471, 1
          %s853 = smul.addr %s852, 16
          %s854 = scalar_lea.vmem [#allocation16], %s853
          %856 = vsyncadd %s851, 0
          %s857 = smul.addr %s41, 4
          %s858 = smul.addr %s857, 4
          %s859 = scalar_lea.hbm %s16, %s858
          %s860 = sshll.u32 %s859, 4
          %s861 = int_to_ptr.hbm [resolvable:$true] %s860
          %s862 = sshll.u32 %s854, 4
          %s863 = int_to_ptr.vmem [resolvable:$true] %s862
          %868 = dma.hbm_to_vmem [thread:$0]  %s861, 256, %s863, %s851, 64, 64, 4
        $region92: #{tpu_custom_call.1} parent=39 // pred_fallthru
          _
        // Predicated region
        $region93: #{tpu_custom_call.1} parent=39 // pred_check
          %p869 = pneg %p507
        $region94: #{tpu_custom_call.1} parent=39 // pred_check_branch
          %871 = sbr.rel (%p869) target = $region96
        $region95: #{tpu_custom_call.1} parent=39 // pred_region
          %p872 = scmp.lt.s32.totalorder %s41, 1
          %s873 = scalar_select %p872, %s41, 1
          %s874 = scalar_lea.vmem %s17, %s873
        $region96: #{tpu_custom_call.1} parent=39 // pred_fallthru
          _
      $region40: #{tpu_custom_call.1} parent=5 // pred_fallthru
        _
      %p875 = scmp.le.s32.totalorder 1, %s33
      %p876 = scmp.lt.s32.totalorder %s33, 3
      %p877 = pnand %p875, %p876
      %p878 = pneg %p877
      // Predicated region
      $region97: #{tpu_custom_call.1} parent=5 // pred_check
        _
      $region98: #{tpu_custom_call.1} parent=5 // pred_check_branch
        %880 = sbr.rel (%p877) target = $region100
      $region99: #{tpu_custom_call.1} parent=5 // pred_region
        %s881 = ssub.s32 %s33, 1
        // Predicated region
        $region101: #{tpu_custom_call.1} parent=99 // pred_check
          %p882 = pneg %p71
        $region102: #{tpu_custom_call.1} parent=99 // pred_check_branch
          %884 = sbr.rel (%p882) target = $region104
        $region103: #{tpu_custom_call.1} parent=99 // pred_region
          %886 = dma.done [#allocation4], 256
        $region104: #{tpu_custom_call.1} parent=99 // pred_fallthru
          _
        // Predicated region
        $region105: #{tpu_custom_call.1} parent=99 // pred_check
          %p887 = pneg %p97
        $region106: #{tpu_custom_call.1} parent=99 // pred_check_branch
          %889 = sbr.rel (%p887) target = $region108
        $region107: #{tpu_custom_call.1} parent=99 // pred_region
          %891 = dma.done [#allocation7], 256
        $region108: #{tpu_custom_call.1} parent=99 // pred_fallthru
          _
        // Predicated region
        $region109: #{tpu_custom_call.1} parent=99 // pred_check
          %p892 = pneg %p123
        $region110: #{tpu_custom_call.1} parent=99 // pred_check_branch
          %894 = sbr.rel (%p892) target = $region112
        $region111: #{tpu_custom_call.1} parent=99 // pred_region
          %896 = dma.done [#allocation7], 256
        $region112: #{tpu_custom_call.1} parent=99 // pred_fallthru
          _
        // Predicated region
        $region113: #{tpu_custom_call.1} parent=99 // pred_check
          %p897 = pneg %p149
        $region114: #{tpu_custom_call.1} parent=99 // pred_check_branch
          %899 = sbr.rel (%p897) target = $region116
        $region115: #{tpu_custom_call.1} parent=99 // pred_region
          %901 = dma.done [#allocation10], 256
        $region116: #{tpu_custom_call.1} parent=99 // pred_fallthru
          _
        %s902 = sand.u32 %s38, 1
        %s903 = scalar_lea.sflag [#allocation4], %s902
        %s904 = sand.u32 %s214, 1
        %s905 = smul.addr %s904, 16
        %s906 = scalar_lea.vmem [#allocation11], %s905
        // Predicated region
        $region117: #{tpu_custom_call.1} parent=99 // pred_check
          %p907 = pneg %p227
        $region118: #{tpu_custom_call.1} parent=99 // pred_check_branch
          %909 = sbr.rel (%p907) target = $region120
        $region119: #{tpu_custom_call.1} parent=99 // pred_region
          %911 = dma.done %s903, 256
        $region120: #{tpu_custom_call.1} parent=99 // pred_fallthru
          _
        %s912 = sand.u32 %s38, 1
        %s913 = scalar_lea.sflag [#allocation4], %s912
        %s914 = sand.u32 %s266, 1
        %s915 = smul.addr %s914, 16
        %s916 = scalar_lea.vmem [#allocation12], %s915
        // Predicated region
        $region121: #{tpu_custom_call.1} parent=99 // pred_check
          %p917 = pneg %p279
        $region122: #{tpu_custom_call.1} parent=99 // pred_check_branch
          %919 = sbr.rel (%p917) target = $region124
        $region123: #{tpu_custom_call.1} parent=99 // pred_region
          %921 = dma.done %s913, 256
        $region124: #{tpu_custom_call.1} parent=99 // pred_fallthru
          _
        %s922 = sand.u32 %s38, 1
        %s923 = scalar_lea.sflag [#allocation4], %s922
        %s924 = sand.u32 %s318, 1
        %s925 = smul.addr %s924, 16
        %s926 = scalar_lea.vmem [#allocation13], %s925
        // Predicated region
        $region125: #{tpu_custom_call.1} parent=99 // pred_check
          %p927 = pneg %p331
        $region126: #{tpu_custom_call.1} parent=99 // pred_check_branch
          %929 = sbr.rel (%p927) target = $region128
        $region127: #{tpu_custom_call.1} parent=99 // pred_region
          %931 = dma.done %s923, 256
        $region128: #{tpu_custom_call.1} parent=99 // pred_fallthru
          _
        %s932 = sand.u32 %s38, 1
        %s933 = scalar_lea.sflag [#allocation4], %s932
        %s934 = sand.u32 %s370, 1
        %s935 = scalar_lea.vmem [#allocation14], %s934
        // Predicated region
        $region129: #{tpu_custom_call.1} parent=99 // pred_check
          %p936 = pneg %p383
        $region130: #{tpu_custom_call.1} parent=99 // pred_check_branch
          %938 = sbr.rel (%p936) target = $region132
        $region131: #{tpu_custom_call.1} parent=99 // pred_region
          %940 = dma.done %s933, 16
        $region132: #{tpu_custom_call.1} parent=99 // pred_fallthru
          _
        %s941 = sand.u32 %s38, 1
        %s942 = scalar_lea.sflag [#allocation4], %s941
        %s943 = sand.u32 %s422, 1
        %s944 = smul.addr %s943, 16
        %s945 = scalar_lea.vmem [#allocation15], %s944
        // Predicated region
        $region133: #{tpu_custom_call.1} parent=99 // pred_check
          %p946 = pneg %p435
        $region134: #{tpu_custom_call.1} parent=99 // pred_check_branch
          %948 = sbr.rel (%p946) target = $region136
        $region135: #{tpu_custom_call.1} parent=99 // pred_region
          %950 = dma.done %s942, 256
        $region136: #{tpu_custom_call.1} parent=99 // pred_fallthru
          _
        %s951 = sand.u32 %s38, 1
        %s952 = scalar_lea.sflag [#allocation4], %s951
        %s953 = sand.u32 %s474, 1
        %s954 = smul.addr %s953, 16
        %s955 = scalar_lea.vmem [#allocation16], %s954
        // Predicated region
        $region137: #{tpu_custom_call.1} parent=99 // pred_check
          %p956 = pneg %p487
        $region138: #{tpu_custom_call.1} parent=99 // pred_check_branch
          %958 = sbr.rel (%p956) target = $region140
        $region139: #{tpu_custom_call.1} parent=99 // pred_region
          %960 = dma.done %s952, 256
        $region140: #{tpu_custom_call.1} parent=99 // pred_fallthru
          _
        %p961 = pneg %p71
        %p962 = pneg %p68
        %p963 = pneg %p97
        %p964 = pneg %p94
        %p965 = pneg %p123
        %p966 = pneg %p120
        %p967 = pneg %p149
        %p968 = pneg %p146
        %p969 = scmp.lt.s32.totalorder %s43, 1
        %s970 = scalar_select %p969, %s43, 1
        %s971 = scalar_lea.vmem %s4, %s970
        %p972 = pneg %p175
        %p973 = pneg %p172
        %p974 = scmp.lt.s32.totalorder %s43, 1
        %s975 = scalar_select %p974, %s43, 1
        %s976 = scalar_lea.vmem %s5, %s975
        %p977 = pneg %p201
        %p978 = pneg %p198
        %s979 = sand.u32 %s38, 1
        %s980 = scalar_lea.sflag [#allocation4], %s979
        %s981 = sand.u32 %s214, 1
        %s982 = smul.addr %s981, 16
        %s983 = scalar_lea.vmem [#allocation11], %s982
        %p984 = pneg %p227
        %p985 = pneg %p224
        %p986 = scmp.lt.s32.totalorder %s43, 1
        %s987 = scalar_select %p986, %s43, 1
        %s988 = scalar_lea.vmem %s7, %s987
        %p989 = pneg %p253
        %p990 = pneg %p250
        %s991 = sand.u32 %s38, 1
        %s992 = scalar_lea.sflag [#allocation4], %s991
        %s993 = sand.u32 %s266, 1
        %s994 = smul.addr %s993, 16
        %s995 = scalar_lea.vmem [#allocation12], %s994
        %p996 = pneg %p279
        %p997 = pneg %p276
        %p998 = scmp.lt.s32.totalorder %s43, 1
        %s999 = scalar_select %p998, %s43, 1
        %s1000 = scalar_lea.vmem %s9, %s999
        %p1001 = pneg %p305
        %p1002 = pneg %p302
        %s1003 = sand.u32 %s38, 1
        %s1004 = scalar_lea.sflag [#allocation4], %s1003
        %s1005 = sand.u32 %s318, 1
        %s1006 = smul.addr %s1005, 16
        %s1007 = scalar_lea.vmem [#allocation13], %s1006
        %p1008 = pneg %p331
        %p1009 = pneg %p328
        %p1010 = scmp.lt.s32.totalorder %s43, 1
        %s1011 = scalar_select %p1010, %s43, 1
        %s1012 = scalar_lea.vmem %s11, %s1011
        %p1013 = pneg %p357
        %p1014 = pneg %p354
        %s1015 = sand.u32 %s38, 1
        %s1016 = scalar_lea.sflag [#allocation4], %s1015
        %s1017 = sand.u32 %s370, 1
        %s1018 = scalar_lea.vmem [#allocation14], %s1017
        %p1019 = pneg %p383
        %p1020 = pneg %p380
        %p1021 = scmp.lt.s32.totalorder %s43, 1
        %s1022 = scalar_select %p1021, %s43, 1
        %s1023 = scalar_lea.vmem %s13, %s1022
        %p1024 = pneg %p409
        %p1025 = pneg %p406
        %s1026 = sand.u32 %s38, 1
        %s1027 = scalar_lea.sflag [#allocation4], %s1026
        %s1028 = sand.u32 %s422, 1
        %s1029 = smul.addr %s1028, 16
        %s1030 = scalar_lea.vmem [#allocation15], %s1029
        %p1031 = pneg %p435
        %p1032 = pneg %p432
        %p1033 = scmp.lt.s32.totalorder %s43, 1
        %s1034 = scalar_select %p1033, %s43, 1
        %s1035 = scalar_lea.vmem %s15, %s1034
        %p1036 = pneg %p461
        %p1037 = pneg %p458
        %s1038 = sand.u32 %s38, 1
        %s1039 = scalar_lea.sflag [#allocation4], %s1038
        %s1040 = sand.u32 %s474, 1
        %s1041 = smul.addr %s1040, 16
        %s1042 = scalar_lea.vmem [#allocation16], %s1041
        %p1043 = pneg %p487
        %p1044 = pneg %p484
        %p1045 = scmp.lt.s32.totalorder %s43, 1
        %s1046 = scalar_select %p1045, %s43, 1
        %s1047 = scalar_lea.vmem %s17, %s1046
        %p1048 = pneg %p513
        %p1049 = pneg %p510
        %p1050 = pneg %p534
        %p1051 = pneg %p531
        %p1052 = pneg %p555
        %p1053 = pneg %p552
        %p1054 = pneg %p581
        %p1055 = pneg %p578
        %p1056 = pneg %p607
        %p1057 = pneg %p604
        %s1058 = smul.u32 2, %s42
        %s1059 = smul.u32 2, %s42
        %s1060 = smul.u32 2, %s42
        %s1061 = smul.u32 2, %s42
        %p1062 = scmp.lt.s32.totalorder %s43, 1
        %s1063 = scalar_select %p1062, %s43, 1
        %s1064 = scalar_lea.vmem %s4, %s1063
        %p1065 = scmp.lt.s32.totalorder %s43, 1
        %s1066 = scalar_select %p1065, %s43, 1
        %s1067 = scalar_lea.vmem %s5, %s1066
        %p1068 = scmp.lt.s32.totalorder %s43, 1
        %s1069 = scalar_select %p1068, %s43, 1
        %s1070 = scalar_lea.vmem %s7, %s1069
        %p1071 = scmp.lt.s32.totalorder %s43, 1
        %s1072 = scalar_select %p1071, %s43, 1
        %s1073 = scalar_lea.vmem %s9, %s1072
        %p1074 = scmp.lt.s32.totalorder %s43, 1
        %s1075 = scalar_select %p1074, %s43, 1
        %s1076 = scalar_lea.vmem %s11, %s1075
        %p1077 = scmp.lt.s32.totalorder %s43, 1
        %s1078 = scalar_select %p1077, %s43, 1
        %s1079 = scalar_lea.vmem %s13, %s1078
        %p1080 = scmp.lt.s32.totalorder %s43, 1
        %s1081 = scalar_select %p1080, %s43, 1
        %s1082 = scalar_lea.vmem %s15, %s1081
        %p1083 = scmp.lt.s32.totalorder %s43, 1
        %s1084 = scalar_select %p1083, %s43, 1
        %s1085 = scalar_lea.vmem %s17, %s1084
        %p1087 = scmp.eq.s32.totalorder %s43, 0
        // Predicated region
        $region141: #{tpu_custom_call.1} parent=99 // pred_check
          %p1088 = pneg %p1087
        $region142: #{tpu_custom_call.1} parent=99 // pred_check_branch
          %1090 = sbr.rel (%p1088) target = $region144
        $region143: #{tpu_custom_call.1} parent=99 // pred_region
          %v1091 = vld [vmem:[#allocation3] sm:$0xff]
          %v1092 = vld [vmem:[#allocation3 + $0x8] sm:$0xff]
          %v1093 = vmul.f32 %v1091, 5.656854
          %v1094 = vmul.f32 %v1092, 5.656854
          %v1095 = vld [vmem:[#allocation6] sm:$0xff]
          %v1096 = vld [vmem:[#allocation6 + $0x8] sm:$0xff]
          %v1097 = vadd.f32 %v1093, %v1095
          %v1098 = vadd.f32 %v1094, %v1096
          %vm1099 = vcmask 261120
          %1100 = vst.msk [vmem:[#allocation2] sm:$0xff] %vm1099, %v1097
          %1101 = vst.msk [vmem:[#allocation2 + $0x8] sm:$0xff] %vm1099, %v1098
        $region144: #{tpu_custom_call.1} parent=99 // pred_fallthru
          _
        %v1102 = vld [vmem:[#allocation2] sm:$0xff]
        %v1103 = vld [vmem:[#allocation2 + $0x8] sm:$0xff]
        %v1104 = vlaneseq
        %v1105 = vshrl.u32 %v1104, 7
        %v1106 = vlaneseq
        %v1107 = vand.u32 %v1106, 127
        %vm1108 = vcmp.le.s32.totalorder %v1107, %v1105
        %v1109 = vld [vmem:[%s1064] sm:$0x1]
        %v1110 = vld [vmem:[%s1067] sm:$0x1]
        %vm1111 = vcmask 261120
        %v1112 = vsel %vm1111, %v1102, 0.0
        %1113 = vadd.xlane.f32.xlu0 %v1112
        %v1114 = vpop.xlane.xlu0 %1113
        %v1115 = vsel %vm1111, %v1103, 0.0
        %1116 = vadd.xlane.f32.xlu0 %v1115
        %v1117 = vpop.xlane.xlu0 %1116
        %v1118 = vrcp.pop 32.0
        %v1119 = vmul.f32 32.0, %v1118
        %v1120 = vsub.f32 1.0, %v1119
        %v1121 = vmul.f32 %v1118, %v1120
        %v1122 = vadd.f32 %v1118, %v1121
        %vm1123 = vweird.f32 %v1118
        %v1124 = vsel %vm1123, %v1118, %v1122
        %v1125 = vmul.f32 %v1114, %v1124
        %v1126 = vmul.f32 %v1117, %v1124
        %v1127 = vsub.f32 %v1102, %v1125
        %v1128 = vsub.f32 %v1103, %v1126
        %v1129 = vmul.f32 %v1127, %v1127
        %v1130 = vmul.f32 %v1128, %v1128
        %v1131 = vsel %vm1111, %v1129, 0.0
        %1132 = vadd.xlane.f32.xlu0 %v1131
        %v1133 = vpop.xlane.xlu0 %1132
        %v1134 = vsel %vm1111, %v1130, 0.0
        %1135 = vadd.xlane.f32.xlu0 %v1134
        %v1136 = vpop.xlane.xlu0 %1135
        %v1137 = vmul.f32 %v1133, %v1124
        %v1138 = vmul.f32 %v1136, %v1124
        %v1139 = vadd.f32 %v1137, 1e-08
        %v1140 = vadd.f32 %v1138, 1e-08
        %v1141 = vrsqrt.pop %v1139
        %v1142 = vmul.f32 %v1141, %v1139
        %v1143 = vmul.f32 %v1142, %v1141
        %v1144 = vmul.f32 0.5, %v1143
        %v1145 = vsub.f32 1.5, %v1144
        %v1146 = vmul.f32 %v1141, %v1145
        %vm1147 = vweird.f32 %v1139
        %vm1148 = vweird.f32 %v1141
        %vm1149 = vmor %vm1147, %vm1148
        %v1150 = vsel %vm1149, %v1141, %v1146
        %v1151 = vrsqrt.pop %v1140
        %v1152 = vmul.f32 %v1151, %v1140
        %v1153 = vmul.f32 %v1152, %v1151
        %v1154 = vmul.f32 0.5, %v1153
        %v1155 = vsub.f32 1.5, %v1154
        %v1156 = vmul.f32 %v1151, %v1155
        %vm1157 = vweird.f32 %v1140
        %vm1158 = vweird.f32 %v1151
        %vm1159 = vmor %vm1157, %vm1158
        %v1160 = vsel %vm1159, %v1151, %v1156
        %v1161 = vmul.f32 %v1127, %v1150
        %v1162 = vmul.f32 %v1128, %v1160
        %v1164 = vperm.slane %v1109, 0
        %v1166 = vmul.f32 %v1161, %v1164
        %v1167 = vmul.f32 %v1162, %v1164
        %v1169 = vperm.slane %v1110, 0
        %v1171 = vadd.f32 %v1166, %v1169
        %v1172 = vadd.f32 %v1167, %v1169
        %v1173 = vpack.c.bf16 %v1172, %v1171
        %v1174 = vld [vmem:[%s906] sm:$0xf]
        %v1175 = vld [vmem:[%s906 + $0x4] sm:$0xf]
        %v1176 = vld [vmem:[%s906 + $0x8] sm:$0xf]
        %v1177 = vld [vmem:[%s906 + $0xc] sm:$0xf]
        %v1178 = vld [vmem:[%s1070] sm:$0x1]
        %v1180 = vperm.slane %v1178, 0
        %v1186 = vunpack.c.l.b16 %v1174
        %v1187 = vunpack.c.l.b16 %v1175
        %v1188 = vunpack.c.l.b16 %v1176
        %v1189 = vunpack.c.l.b16 %v1177
        %v1190 = vpack.c.b16 %v1187, %v1186
        %v1191 = vpack.c.b16 %v1189, %v1188
        %v1195 = vsel %vm1111, %v1173, 0
        %1197 = vmatpush.bf16.msra.mxu0 0
        %1198 = vmatpush.bf16.msra.mxu0 0
        %1199 = vmatpush.bf16.msra.mxu0 0
        %1200 = vmatpush.bf16.msra.mxu0 0
        %1201 = vmatpush.bf16.msra.mxu0 0
        %1202 = vmatpush.bf16.msra.mxu0 0
        %1203 = vmatpush.bf16.msra.mxu0 %v1191
        %1204 = vmatpush.bf16.msra.mxu0 %v1190
        %1205 = vmatmul.bf16.gmra.mxu0 %v1195
        %v1206 = vpop.f32.mrf.mxu0
        %v1207 = vadd.f32 %v1180, %v1206
        %v1208 = vpop.f32.mrf.mxu0
        %v1209 = vadd.f32 %v1180, %v1208
        %1210 = vdwg.mxu0
        %v1211 = vpack.c.bf16 %v1103, %v1102
        %v1212 = vld [vmem:[%s916] sm:$0xf]
        %v1213 = vld [vmem:[%s916 + $0x4] sm:$0xf]
        %v1214 = vld [vmem:[%s916 + $0x8] sm:$0xf]
        %v1215 = vld [vmem:[%s916 + $0xc] sm:$0xf]
        %v1216 = vld [vmem:[%s1073] sm:$0x1]
        %v1218 = vperm.slane %v1216, 0
        %v1224 = vunpack.c.l.b16 %v1212
        %v1225 = vunpack.c.l.b16 %v1213
        %v1226 = vunpack.c.l.b16 %v1214
        %v1227 = vunpack.c.l.b16 %v1215
        %v1228 = vpack.c.b16 %v1225, %v1224
        %v1229 = vpack.c.b16 %v1227, %v1226
        %v1233 = vsel %vm1111, %v1211, 0
        %1235 = vmatpush.bf16.msra.mxu0 0
        %1236 = vmatpush.bf16.msra.mxu0 0
        %1237 = vmatpush.bf16.msra.mxu0 0
        %1238 = vmatpush.bf16.msra.mxu0 0
        %1239 = vmatpush.bf16.msra.mxu0 0
        %1240 = vmatpush.bf16.msra.mxu0 0
        %1241 = vmatpush.bf16.msra.mxu0 %v1229
        %1242 = vmatpush.bf16.msra.mxu0 %v1228
        %1243 = vmatmul.bf16.gmra.mxu0 %v1233
        %v1244 = vpop.f32.mrf.mxu0
        %v1245 = vadd.f32 %v1218, %v1244
        %v1246 = vpop.f32.mrf.mxu0
        %v1247 = vadd.f32 %v1218, %v1246
        %1248 = vdwg.mxu0
        %v1249 = vmul.f32 %v1207, 0.25
        %v1250 = vmul.f32 %v1209, 0.25
        %v1251 = vld [vmem:[%s926] sm:$0xf]
        %v1252 = vld [vmem:[%s926 + $0x4] sm:$0xf]
        %v1253 = vld [vmem:[%s926 + $0x8] sm:$0xf]
        %v1254 = vld [vmem:[%s926 + $0xc] sm:$0xf]
        %v1255 = vpack.c.bf16 %v1249, %v1249
        %v1256 = vpack.c.bf16 %v1250, %v1250
        %v1257 = vpack.c.bf16 %v1245, %v1245
        %v1258 = vpack.c.bf16 %v1247, %v1247
        %vm1259 = vcmask 130048
        %v1261 = vsel %vm1259, %v1255, 0
        %v1264 = vsel %vm1259, %v1257, 0
        %1266 = vmatpush.bf16.xpose.msra.mxu0 0
        %1267 = vmatpush.bf16.xpose.msra.mxu0 0
        %1268 = vmatpush.bf16.xpose.msra.mxu0 0
        %1269 = vmatpush.bf16.xpose.msra.mxu0 0
        %1270 = vmatpush.bf16.xpose.msra.mxu0 0
        %1271 = vmatpush.bf16.xpose.msra.mxu0 0
        %1272 = vmatpush.bf16.xpose.msra.mxu0 0
        %1273 = vmatpush.bf16.xpose.msra.mxu0 %v1264
        %1274 = vmatmul.bf16.gmra.mxu0 %v1261
        %v1275 = vpop.f32.mrf.mxu0
        %v1276 = vadd.f32 0.0, %v1275
        %v1277 = vpop.f32.mrf.mxu0
        %1278 = vdwg.mxu0
        %v1280 = vsel %vm1259, %v1256, 0
        %v1283 = vsel %vm1259, %v1258, 0
        %1285 = vmatpush.bf16.xpose.msra.mxu0 0
        %1286 = vmatpush.bf16.xpose.msra.mxu0 0
        %1287 = vmatpush.bf16.xpose.msra.mxu0 0
        %1288 = vmatpush.bf16.xpose.msra.mxu0 0
        %1289 = vmatpush.bf16.xpose.msra.mxu0 0
        %1290 = vmatpush.bf16.xpose.msra.mxu0 0
        %1291 = vmatpush.bf16.xpose.msra.mxu0 0
        %1292 = vmatpush.bf16.xpose.msra.mxu0 %v1283
        %1293 = vmatmul.bf16.gmra.mxu0 %v1280
        %v1294 = vpop.f32.mrf.mxu0
        %v1295 = vadd.f32 0.0, %v1294
        %v1296 = vpop.f32.mrf.mxu0
        %1297 = vdwg.mxu0
        %v1298 = vsel %vm1108, 1, 0
        %vm1299 = vcmp.eq.s32.totalorder %v1298, 1
        %v1300 = vsel %vm1299, %v1276, -1e+30
        %v1301 = vsel %vm1299, %v1295, -1e+30
        %vm1302 = vcmask 64512
        %v1303 = vsel %vm1302, %v1300, -inf
        %1304 = vmax.xlane.f32.xlu0 %v1303
        %v1305 = vpop.xlane.xlu0 %1304
        %v1306 = vsel %vm1302, %v1301, -inf
        %1307 = vmax.xlane.f32.xlu0 %v1306
        %v1308 = vpop.xlane.xlu0 %1307
        %v1309 = vsub.f32 %v1300, %v1305
        %v1310 = vsub.f32 %v1301, %v1308
        %v1311 = vmul.f32 %v1309, 1.442695
        %v1312 = vpow.pop %v1311
        %v1313 = vmul.f32 %v1310, 1.442695
        %v1314 = vpow.pop %v1313
        %v1315 = vsel %vm1302, %v1312, 0.0
        %1316 = vadd.xlane.f32.xlu0 %v1315
        %v1317 = vpop.xlane.xlu0 %1316
        %v1318 = vsel %vm1302, %v1314, 0.0
        %1319 = vadd.xlane.f32.xlu0 %v1318
        %v1320 = vpop.xlane.xlu0 %1319
        %v1321 = vrcp.pop %v1317
        %v1322 = vrcp.pop %v1320
        %v1323 = vmul.f32 %v1312, %v1321
        %v1324 = vmul.f32 %v1314, %v1322
        %v1325 = vpack.c.bf16 %v1323, %v1323
        %v1326 = vpack.c.bf16 %v1324, %v1324
        %v1328 = vunpack.c.l.b16 %v1257
        %v1329 = vpack.c.b16 %v1328, %v1328
        %1330 = vrot.lane.b32.xlu0 %v1329, 96
        %v1331 = vpop.permute.xlu0 %1330
        %v1333 = vsel %vm1302, %v1325, 0
        %vm1335 = vcmask 1043456
        %v1337 = vsel %vm1335, %v1331, 0
        %1339 = vmatpush.bf16.msra.mxu0 0
        %1340 = vmatpush.bf16.msra.mxu0 0
        %1341 = vmatpush.bf16.msra.mxu0 0
        %1342 = vmatpush.bf16.msra.mxu0 0
        %1343 = vmatpush.bf16.msra.mxu0 0
        %1344 = vmatpush.bf16.msra.mxu0 0
        %1345 = vmatpush.bf16.msra.mxu0 0
        %1346 = vmatpush.bf16.msra.mxu0 %v1337
        %1347 = vmatmul.bf16.gmra.mxu0 %v1333
        %v1348 = vpop.f32.mrf.mxu0
        %v1349 = vadd.f32 0.0, %v1348
        %v1350 = vpop.f32.mrf.mxu0
        %1351 = vdwg.mxu0
        %v1353 = vunpack.c.l.b16 %v1258
        %v1354 = vpack.c.b16 %v1353, %v1353
        %1355 = vrot.lane.b32.xlu0 %v1354, 96
        %v1356 = vpop.permute.xlu0 %1355
        %v1358 = vsel %vm1302, %v1326, 0
        %v1361 = vsel %vm1335, %v1356, 0
        %1363 = vmatpush.bf16.msra.mxu0 0
        %1364 = vmatpush.bf16.msra.mxu0 0
        %1365 = vmatpush.bf16.msra.mxu0 0
        %1366 = vmatpush.bf16.msra.mxu0 0
        %1367 = vmatpush.bf16.msra.mxu0 0
        %1368 = vmatpush.bf16.msra.mxu0 0
        %1369 = vmatpush.bf16.msra.mxu0 0
        %1370 = vmatpush.bf16.msra.mxu0 %v1361
        %1371 = vmatmul.bf16.gmra.mxu0 %v1358
        %v1372 = vpop.f32.mrf.mxu0
        %v1373 = vadd.f32 0.0, %v1372
        %v1374 = vpop.f32.mrf.mxu0
        %1375 = vdwg.mxu0
        %v1376 = vpack.c.bf16 %v1373, %v1349
        %v1378 = vunpack.c.l.b16 %v1255
        %v1379 = vpack.c.b16 %v1378, %v1378
        %1380 = vrot.lane.b32.xlu0 %v1379, 112
        %v1381 = vpop.permute.xlu0 %1380
        %1382 = vrot.lane.b32.xlu0 %v1329, 112
        %v1383 = vpop.permute.xlu0 %1382
        %v1385 = vsel %vm1259, %v1381, 0
        %v1388 = vsel %vm1259, %v1383, 0
        %1390 = vmatpush.bf16.xpose.msra.mxu0 0
        %1391 = vmatpush.bf16.xpose.msra.mxu0 0
        %1392 = vmatpush.bf16.xpose.msra.mxu0 0
        %1393 = vmatpush.bf16.xpose.msra.mxu0 0
        %1394 = vmatpush.bf16.xpose.msra.mxu0 0
        %1395 = vmatpush.bf16.xpose.msra.mxu0 0
        %1396 = vmatpush.bf16.xpose.msra.mxu0 0
        %1397 = vmatpush.bf16.xpose.msra.mxu0 %v1388
        %1398 = vmatmul.bf16.gmra.mxu0 %v1385
        %v1399 = vpop.f32.mrf.mxu0
        %v1400 = vadd.f32 0.0, %v1399
        %v1401 = vpop.f32.mrf.mxu0
        %1402 = vdwg.mxu0
        %v1404 = vunpack.c.l.b16 %v1256
        %v1405 = vpack.c.b16 %v1404, %v1404
        %1406 = vrot.lane.b32.xlu0 %v1405, 112
        %v1407 = vpop.permute.xlu0 %1406
        %1408 = vrot.lane.b32.xlu0 %v1354, 112
        %v1409 = vpop.permute.xlu0 %1408
        %v1411 = vsel %vm1259, %v1407, 0
        %v1414 = vsel %vm1259, %v1409, 0
        %1416 = vmatpush.bf16.xpose.msra.mxu0 0
        %1417 = vmatpush.bf16.xpose.msra.mxu0 0
        %1418 = vmatpush.bf16.xpose.msra.mxu0 0
        %1419 = vmatpush.bf16.xpose.msra.mxu0 0
        %1420 = vmatpush.bf16.xpose.msra.mxu0 0
        %1421 = vmatpush.bf16.xpose.msra.mxu0 0
        %1422 = vmatpush.bf16.xpose.msra.mxu0 0
        %1423 = vmatpush.bf16.xpose.msra.mxu0 %v1414
        %1424 = vmatmul.bf16.gmra.mxu0 %v1411
        %v1425 = vpop.f32.mrf.mxu0
        %v1426 = vadd.f32 0.0, %v1425
        %v1427 = vpop.f32.mrf.mxu0
        %1428 = vdwg.mxu0
        %v1429 = vsel %vm1299, %v1400, -1e+30
        %v1430 = vsel %vm1299, %v1426, -1e+30
        %v1431 = vsel %vm1302, %v1429, -inf
        %1432 = vmax.xlane.f32.xlu0 %v1431
        %v1433 = vpop.xlane.xlu0 %1432
        %v1434 = vsel %vm1302, %v1430, -inf
        %1435 = vmax.xlane.f32.xlu0 %v1434
        %v1436 = vpop.xlane.xlu0 %1435
        %v1437 = vsub.f32 %v1429, %v1433
        %v1438 = vsub.f32 %v1430, %v1436
        %v1439 = vmul.f32 %v1437, 1.442695
        %v1440 = vpow.pop %v1439
        %v1441 = vmul.f32 %v1438, 1.442695
        %v1442 = vpow.pop %v1441
        %v1443 = vsel %vm1302, %v1440, 0.0
        %1444 = vadd.xlane.f32.xlu0 %v1443
        %v1445 = vpop.xlane.xlu0 %1444
        %v1446 = vsel %vm1302, %v1442, 0.0
        %1447 = vadd.xlane.f32.xlu0 %v1446
        %v1448 = vpop.xlane.xlu0 %1447
        %v1449 = vrcp.pop %v1445
        %v1450 = vrcp.pop %v1448
        %v1451 = vmul.f32 %v1440, %v1449
        %v1452 = vmul.f32 %v1442, %v1450
        %v1453 = vpack.c.bf16 %v1451, %v1451
        %v1454 = vpack.c.bf16 %v1452, %v1452
        %1455 = vrot.lane.b32.xlu0 %v1329, 80
        %v1456 = vpop.permute.xlu0 %1455
        %v1458 = vsel %vm1302, %v1453, 0
        %v1461 = vsel %vm1335, %v1456, 0
        %1463 = vmatpush.bf16.msra.mxu0 0
        %1464 = vmatpush.bf16.msra.mxu0 0
        %1465 = vmatpush.bf16.msra.mxu0 0
        %1466 = vmatpush.bf16.msra.mxu0 0
        %1467 = vmatpush.bf16.msra.mxu0 0
        %1468 = vmatpush.bf16.msra.mxu0 0
        %1469 = vmatpush.bf16.msra.mxu0 0
        %1470 = vmatpush.bf16.msra.mxu0 %v1461
        %1471 = vmatmul.bf16.gmra.mxu0 %v1458
        %v1472 = vpop.f32.mrf.mxu0
        %v1473 = vadd.f32 0.0, %v1472
        %v1474 = vpop.f32.mrf.mxu0
        %1475 = vdwg.mxu0
        %1476 = vrot.lane.b32.xlu0 %v1354, 80
        %v1477 = vpop.permute.xlu0 %1476
        %v1479 = vsel %vm1302, %v1454, 0
        %v1482 = vsel %vm1335, %v1477, 0
        %1484 = vmatpush.bf16.msra.mxu0 0
        %1485 = vmatpush.bf16.msra.mxu0 0
        %1486 = vmatpush.bf16.msra.mxu0 0
        %1487 = vmatpush.bf16.msra.mxu0 0
        %1488 = vmatpush.bf16.msra.mxu0 0
        %1489 = vmatpush.bf16.msra.mxu0 0
        %1490 = vmatpush.bf16.msra.mxu0 0
        %1491 = vmatpush.bf16.msra.mxu0 %v1482
        %1492 = vmatmul.bf16.gmra.mxu0 %v1479
        %v1493 = vpop.f32.mrf.mxu0
        %v1494 = vadd.f32 0.0, %v1493
        %v1495 = vpop.f32.mrf.mxu0
        %1496 = vdwg.mxu0
        %v1497 = vpack.c.bf16 %v1494, %v1473
        %v1500 = vunpack.c.l.b16 %v1253
        %v1501 = vunpack.c.l.b16 %v1254
        %v1502 = vpack.c.b16 %v1501, %v1500
        %v1505 = vsel %vm1259, %v1497, 0
        %1507 = vmatpush.bf16.msra.mxu0 0
        %1508 = vmatpush.bf16.msra.mxu0 0
        %1509 = vmatpush.bf16.msra.mxu0 0
        %1510 = vmatpush.bf16.msra.mxu0 0
        %1511 = vmatpush.bf16.msra.mxu0 0
        %1512 = vmatpush.bf16.msra.mxu0 0
        %1513 = vmatpush.bf16.msra.mxu0 0
        %1514 = vmatpush.bf16.msra.mxu0 %v1502
        %1515 = vmatmul.bf16.gmra.mxu0 %v1505
        %v1516 = vpop.f32.mrf.mxu0
        %v1517 = vadd.f32 0.0, %v1516
        %v1518 = vpop.f32.mrf.mxu0
        %v1519 = vadd.f32 0.0, %v1518
        %1520 = vdwg.mxu0
        %v1523 = vunpack.c.l.b16 %v1251
        %v1524 = vunpack.c.l.b16 %v1252
        %v1525 = vpack.c.b16 %v1524, %v1523
        %v1528 = vsel %vm1259, %v1376, 0
        %1530 = vmatpush.bf16.msra.mxu0 0
        %1531 = vmatpush.bf16.msra.mxu0 0
        %1532 = vmatpush.bf16.msra.mxu0 0
        %1533 = vmatpush.bf16.msra.mxu0 0
        %1534 = vmatpush.bf16.msra.mxu0 0
        %1535 = vmatpush.bf16.msra.mxu0 0
        %1536 = vmatpush.bf16.msra.mxu0 0
        %1537 = vmatpush.bf16.msra.mxu0 %v1525
        %1538 = vmatmul.bf16.gmra.mxu0 %v1528
        %v1539 = vpop.f32.mrf.mxu0
        %v1540 = vadd.f32 %v1517, %v1539
        %v1541 = vpop.f32.mrf.mxu0
        %v1542 = vadd.f32 %v1519, %v1541
        %1543 = vdwg.mxu0
        %v1544 = vld [vmem:[%s1076] sm:$0x1]
        %v1546 = vperm.slane %v1544, 0
        %v1548 = vadd.f32 %v1540, %v1546
        %v1549 = vadd.f32 %v1542, %v1546
        %v1550 = vadd.f32 %v1171, %v1548
        %v1551 = vadd.f32 %v1172, %v1549
        %v1552 = vld [vmem:[%s935] sm:$0x1]
        %v1553 = vld [vmem:[%s1079] sm:$0x1]
        %v1554 = vsel %vm1111, %v1550, 0.0
        %1555 = vadd.xlane.f32.xlu0 %v1554
        %v1556 = vpop.xlane.xlu0 %1555
        %v1557 = vsel %vm1111, %v1551, 0.0
        %1558 = vadd.xlane.f32.xlu0 %v1557
        %v1559 = vpop.xlane.xlu0 %1558
        %v1560 = vmul.f32 %v1556, %v1124
        %v1561 = vmul.f32 %v1559, %v1124
        %v1562 = vsub.f32 %v1550, %v1560
        %v1563 = vsub.f32 %v1551, %v1561
        %v1564 = vmul.f32 %v1562, %v1562
        %v1565 = vmul.f32 %v1563, %v1563
        %v1566 = vsel %vm1111, %v1564, 0.0
        %1567 = vadd.xlane.f32.xlu0 %v1566
        %v1568 = vpop.xlane.xlu0 %1567
        %v1569 = vsel %vm1111, %v1565, 0.0
        %1570 = vadd.xlane.f32.xlu0 %v1569
        %v1571 = vpop.xlane.xlu0 %1570
        %v1572 = vmul.f32 %v1568, %v1124
        %v1573 = vmul.f32 %v1571, %v1124
        %v1574 = vadd.f32 %v1572, 1e-08
        %v1575 = vadd.f32 %v1573, 1e-08
        %v1576 = vrsqrt.pop %v1574
        %v1577 = vmul.f32 %v1576, %v1574
        %v1578 = vmul.f32 %v1577, %v1576
        %v1579 = vmul.f32 0.5, %v1578
        %v1580 = vsub.f32 1.5, %v1579
        %v1581 = vmul.f32 %v1576, %v1580
        %vm1582 = vweird.f32 %v1574
        %vm1583 = vweird.f32 %v1576
        %vm1584 = vmor %vm1582, %vm1583
        %v1585 = vsel %vm1584, %v1576, %v1581
        %v1586 = vrsqrt.pop %v1575
        %v1587 = vmul.f32 %v1586, %v1575
        %v1588 = vmul.f32 %v1587, %v1586
        %v1589 = vmul.f32 0.5, %v1588
        %v1590 = vsub.f32 1.5, %v1589
        %v1591 = vmul.f32 %v1586, %v1590
        %vm1592 = vweird.f32 %v1575
        %vm1593 = vweird.f32 %v1586
        %vm1594 = vmor %vm1592, %vm1593
        %v1595 = vsel %vm1594, %v1586, %v1591
        %v1596 = vmul.f32 %v1562, %v1585
        %v1597 = vmul.f32 %v1563, %v1595
        %v1599 = vperm.slane %v1552, 0
        %v1601 = vmul.f32 %v1596, %v1599
        %v1602 = vmul.f32 %v1597, %v1599
        %v1604 = vperm.slane %v1553, 0
        %v1606 = vadd.f32 %v1601, %v1604
        %v1607 = vadd.f32 %v1602, %v1604
        %v1608 = vpack.c.bf16 %v1607, %v1606
        %v1609 = vld [vmem:[%s945] sm:$0xf]
        %v1610 = vld [vmem:[%s945 + $0x4] sm:$0xf]
        %v1611 = vld [vmem:[%s945 + $0x8] sm:$0xf]
        %v1612 = vld [vmem:[%s945 + $0xc] sm:$0xf]
        %v1613 = vld [vmem:[%s1082] sm:$0x1]
        %v1615 = vperm.slane %v1613, 0
        %v1621 = vunpack.c.l.b16 %v1609
        %v1622 = vunpack.c.l.b16 %v1610
        %v1623 = vunpack.c.l.b16 %v1611
        %v1624 = vunpack.c.l.b16 %v1612
        %v1625 = vpack.c.b16 %v1622, %v1621
        %v1626 = vpack.c.b16 %v1624, %v1623
        %v1630 = vsel %vm1111, %v1608, 0
        %1632 = vmatpush.bf16.msra.mxu0 0
        %1633 = vmatpush.bf16.msra.mxu0 0
        %1634 = vmatpush.bf16.msra.mxu0 0
        %1635 = vmatpush.bf16.msra.mxu0 0
        %1636 = vmatpush.bf16.msra.mxu0 0
        %1637 = vmatpush.bf16.msra.mxu0 0
        %1638 = vmatpush.bf16.msra.mxu0 %v1626
        %1639 = vmatpush.bf16.msra.mxu0 %v1625
        %1640 = vmatmul.bf16.gmra.mxu0 %v1630
        %v1641 = vpop.f32.mrf.mxu0
        %v1642 = vadd.f32 %v1615, %v1641
        %v1643 = vpop.f32.mrf.mxu0
        %v1644 = vadd.f32 %v1615, %v1643
        %1645 = vdwg.mxu0
        %v1646 = vmax.f32 %v1642, 0.0
        %v1647 = vmax.f32 %v1644, 0.0
        %v1648 = vpack.c.bf16 %v1647, %v1646
        %v1649 = vld [vmem:[%s955] sm:$0xf]
        %v1650 = vld [vmem:[%s955 + $0x4] sm:$0xf]
        %v1651 = vld [vmem:[%s955 + $0x8] sm:$0xf]
        %v1652 = vld [vmem:[%s955 + $0xc] sm:$0xf]
        %v1653 = vld [vmem:[%s1085] sm:$0x1]
        %v1655 = vperm.slane %v1653, 0
        %v1661 = vunpack.c.l.b16 %v1649
        %v1662 = vunpack.c.l.b16 %v1650
        %v1663 = vunpack.c.l.b16 %v1651
        %v1664 = vunpack.c.l.b16 %v1652
        %v1665 = vpack.c.b16 %v1662, %v1661
        %v1666 = vpack.c.b16 %v1664, %v1663
        %v1670 = vsel %vm1111, %v1648, 0
        %1672 = vmatpush.bf16.msra.mxu0 0
        %1673 = vmatpush.bf16.msra.mxu0 0
        %1674 = vmatpush.bf16.msra.mxu0 0
        %1675 = vmatpush.bf16.msra.mxu0 0
        %1676 = vmatpush.bf16.msra.mxu0 0
        %1677 = vmatpush.bf16.msra.mxu0 0
        %1678 = vmatpush.bf16.msra.mxu0 %v1666
        %1679 = vmatpush.bf16.msra.mxu0 %v1665
        %1680 = vmatmul.bf16.gmra.mxu0 %v1670
        %v1681 = vpop.f32.mrf.mxu0
        %v1682 = vadd.f32 %v1655, %v1681
        %v1683 = vpop.f32.mrf.mxu0
        %v1684 = vadd.f32 %v1655, %v1683
        %1685 = vdwg.mxu0
        %v1686 = vadd.f32 %v1606, %v1682
        %v1687 = vadd.f32 %v1607, %v1684
        %1688 = vst.msk [vmem:[#allocation2] sm:$0xff] %vm1111, %v1686
        %1689 = vst.msk [vmem:[#allocation2 + $0x8] sm:$0xff] %vm1111, %v1687
        %p1690 = scmp.eq.s32.totalorder %s43, 1
        // Predicated region
        $region145: #{tpu_custom_call.1} parent=99 // pred_check
          %p1691 = pneg %p1690
        $region146: #{tpu_custom_call.1} parent=99 // pred_check_branch
          %1693 = sbr.rel (%p1691) target = $region148
        $region147: #{tpu_custom_call.1} parent=99 // pred_region
          %v1694 = vld [vmem:[%s18] sm:$0x1]
          %v1695 = vld [vmem:[%s19] sm:$0x1]
          %v1696 = vsel %vm1111, %v1686, 0.0
          %1697 = vadd.xlane.f32.xlu0 %v1696
          %v1698 = vpop.xlane.xlu0 %1697
          %v1699 = vsel %vm1111, %v1687, 0.0
          %1700 = vadd.xlane.f32.xlu0 %v1699
          %v1701 = vpop.xlane.xlu0 %1700
          %v1702 = vmul.f32 %v1698, %v1124
          %v1703 = vmul.f32 %v1701, %v1124
          %v1704 = vsub.f32 %v1686, %v1702
          %v1705 = vsub.f32 %v1687, %v1703
          %v1706 = vmul.f32 %v1704, %v1704
          %v1707 = vmul.f32 %v1705, %v1705
          %v1708 = vsel %vm1111, %v1706, 0.0
          %1709 = vadd.xlane.f32.xlu0 %v1708
          %v1710 = vpop.xlane.xlu0 %1709
          %v1711 = vsel %vm1111, %v1707, 0.0
          %1712 = vadd.xlane.f32.xlu0 %v1711
          %v1713 = vpop.xlane.xlu0 %1712
          %v1714 = vmul.f32 %v1710, %v1124
          %v1715 = vmul.f32 %v1713, %v1124
          %v1716 = vadd.f32 %v1714, 1e-08
          %v1717 = vadd.f32 %v1715, 1e-08
          %v1718 = vrsqrt.pop %v1716
          %v1719 = vmul.f32 %v1718, %v1716
          %v1720 = vmul.f32 %v1719, %v1718
          %v1721 = vmul.f32 0.5, %v1720
          %v1722 = vsub.f32 1.5, %v1721
          %v1723 = vmul.f32 %v1718, %v1722
          %vm1724 = vweird.f32 %v1716
          %vm1725 = vweird.f32 %v1718
          %vm1726 = vmor %vm1724, %vm1725
          %v1727 = vsel %vm1726, %v1718, %v1723
          %v1728 = vrsqrt.pop %v1717
          %v1729 = vmul.f32 %v1728, %v1717
          %v1730 = vmul.f32 %v1729, %v1728
          %v1731 = vmul.f32 0.5, %v1730
          %v1732 = vsub.f32 1.5, %v1731
          %v1733 = vmul.f32 %v1728, %v1732
          %vm1734 = vweird.f32 %v1717
          %vm1735 = vweird.f32 %v1728
          %vm1736 = vmor %vm1734, %vm1735
          %v1737 = vsel %vm1736, %v1728, %v1733
          %v1738 = vmul.f32 %v1704, %v1727
          %v1739 = vmul.f32 %v1705, %v1737
          %v1741 = vperm.slane %v1694, 0
          %v1743 = vmul.f32 %v1738, %v1741
          %v1744 = vmul.f32 %v1739, %v1741
          %v1746 = vperm.slane %v1695, 0
          %v1748 = vadd.f32 %v1743, %v1746
          %v1749 = vadd.f32 %v1744, %v1746
          %v1750 = vld [vmem:[#allocation8] sm:$0xff]
          %v1751 = vld [vmem:[#allocation8 + $0x8] sm:$0xff]
          %v1752 = vmul.f32 %v1748, %v1750
          %v1753 = vmul.f32 %v1749, %v1751
          %v1754 = vsel %vm1111, %v1752, 0.0
          %1755 = vadd.xlane.f32.xlu0 %v1754
          %v1756 = vpop.xlane.xlu0 %1755
          %v1757 = vsel %vm1111, %v1753, 0.0
          %1758 = vadd.xlane.f32.xlu0 %v1757
          %v1759 = vpop.xlane.xlu0 %1758
          %v1762 = vperm.slane %v1756, %v1107
          %v1763 = vperm.slane %v1759, %v1107
          %vm1764 = vcmask 1041409
          %v1765 = vsel %vm1764, %v1763, %v1762
          %vm1767 = vcmask 58368
          %1768 = vst.msk [vmem:[#allocation17] sm:$0x3] %vm1767, %v1765
          %v1769 = vld [vmem:[#allocation9] sm:$0xff]
          %v1770 = vld [vmem:[#allocation9 + $0x8] sm:$0xff]
          %v1771 = vmul.f32 %v1748, %v1769
          %v1772 = vmul.f32 %v1749, %v1770
          %v1773 = vsel %vm1111, %v1771, 0.0
          %1774 = vadd.xlane.f32.xlu0 %v1773
          %v1775 = vpop.xlane.xlu0 %1774
          %v1776 = vsel %vm1111, %v1772, 0.0
          %1777 = vadd.xlane.f32.xlu0 %v1776
          %v1778 = vpop.xlane.xlu0 %1777
          %v1781 = vperm.slane %v1775, %v1107
          %v1782 = vperm.slane %v1778, %v1107
          %v1783 = vsel %vm1764, %v1782, %v1781
          %1785 = vst.msk [vmem:[#allocation18] sm:$0x3] %vm1767, %v1783
        $region148: #{tpu_custom_call.1} parent=99 // pred_fallthru
          _
        // Predicated region
        $region149: #{tpu_custom_call.1} parent=99 // pred_check
          %p1786 = pneg %p578
        $region150: #{tpu_custom_call.1} parent=99 // pred_check_branch
          %1788 = sbr.rel (%p1786) target = $region152
        $region151: #{tpu_custom_call.1} parent=99 // pred_region
          %1790 = vsyncadd [#allocation5], 0
          %s1791 = smul.addr %s42, 2
          %s1792 = scalar_lea.hbm %s20, %s1791
          %s1794 = sshll.u32 [#allocation17], 4
          %s1795 = int_to_ptr.vmem [resolvable:$true] %s1794
          %s1796 = sshll.u32 %s1792, 4
          %s1797 = int_to_ptr.hbm [resolvable:$true] %s1796
          %1799 = dma.vmem_to_hbm [thread:$0]  %s1795, 32, %s1797, [#allocation5]
        $region152: #{tpu_custom_call.1} parent=99 // pred_fallthru
          _
        // Predicated region
        $region153: #{tpu_custom_call.1} parent=99 // pred_check
          %p1800 = pneg %p604
        $region154: #{tpu_custom_call.1} parent=99 // pred_check_branch
          %1802 = sbr.rel (%p1800) target = $region156
        $region155: #{tpu_custom_call.1} parent=99 // pred_region
          %1804 = vsyncadd [#allocation19], 0
          %s1805 = smul.addr %s42, 2
          %s1806 = scalar_lea.hbm %s21, %s1805
          %s1808 = sshll.u32 [#allocation18], 4
          %s1809 = int_to_ptr.vmem [resolvable:$true] %s1808
          %s1810 = sshll.u32 %s1806, 4
          %s1811 = int_to_ptr.hbm [resolvable:$true] %s1810
          %1813 = dma.vmem_to_hbm [thread:$0]  %s1809, 32, %s1811, [#allocation19]
        $region156: #{tpu_custom_call.1} parent=99 // pred_fallthru
          _
        // Predicated region
        $region157: #{tpu_custom_call.1} parent=99 // pred_check
          %p1814 = pneg %p578
        $region158: #{tpu_custom_call.1} parent=99 // pred_check_branch
          %1816 = sbr.rel (%p1814) target = $region160
        $region159: #{tpu_custom_call.1} parent=99 // pred_region
          %1818 = dma.done [#allocation5], 32
        $region160: #{tpu_custom_call.1} parent=99 // pred_fallthru
          _
        // Predicated region
        $region161: #{tpu_custom_call.1} parent=99 // pred_check
          %p1819 = pneg %p604
        $region162: #{tpu_custom_call.1} parent=99 // pred_check_branch
          %1821 = sbr.rel (%p1819) target = $region164
        $region163: #{tpu_custom_call.1} parent=99 // pred_region
          %1823 = dma.done [#allocation19], 32
        $region164: #{tpu_custom_call.1} parent=99 // pred_fallthru
          _
      $region100: #{tpu_custom_call.1} parent=5 // pred_fallthru
        _
      %p1824 = scmp.le.s32.totalorder 2, %s33
      // Predicated region
      $region165: #{tpu_custom_call.1} parent=5 // pred_check
        %p1825 = pneg %p1824
      $region166: #{tpu_custom_call.1} parent=5 // pred_check_branch
        %1827 = sbr.rel (%p1825) target = $region168
      $region167: #{tpu_custom_call.1} parent=5 // pred_region
        %s1828 = ssub.s32 %s33, 2
      $region168: #{tpu_custom_call.1} parent=5 // pred_fallthru
        _
    $region6: #{tpu_custom_call.1} parent=1 // loop_footer
      %s37 = sadd.s32 1, %s33
    $region7: #{tpu_custom_call.1} parent=1 // loop_footer_branch
      %32 = sbr.rel target = $region3
    $region8: #{tpu_custom_call.1} parent=1 // loop_exit
      _
    %1829 = vsyncpa [#allocation4], 1
    %s1830 = scalar_lea.sflag [#allocation4], 1
    %1831 = vsyncpa %s1830, 1
    %1832 = vsyncpa [#allocation7], 1
    %1833 = vsyncpa [#allocation10], 1
    %1834 = vsyncpa [#allocation5], 1
    %s1835 = scalar_lea.sflag [#allocation5], 1
    %1836 = vsyncpa %s1835, 1
    %1837 = vsyncpa [#allocation19], 1

</llo_original>
